<compile_context>
chip_gen: v6e
topology: v6e:2x2x1
jax: 0.10.0
libtpu: 0.0.40
codegen_flags: <defaults>
</compile_context>

<pallas_src>
import jax
import jax.numpy as jnp
from jax.experimental import pallas as pl
from jax.experimental.pallas import tpu as pltpu


FC_UNITS = (400, 300)     # hidden sizes, matching the PyTorch module
_LANE = 128
_BATCH_ALIGN = 16         # bf16 vregs are [16, 128]; 16-aligned batch tiles
_MAX_TB = 4096            # per-tile cap (keeps VMEM well under v7x's 64 MiB)


def _cdiv(a, b):
    return (a + b - 1) // b


def _round_up(x, m):
    return (x + m - 1) // m * m


def _actor_kernel(x_ref, w1_ref, b1_ref, w2_ref, b2_ref, w3_ref, b3_ref, out_ref):
    # Layer 1: bf16 MXU matmul, f32 accumulate; bias + relu in f32.
    x = x_ref[...].astype(jnp.bfloat16)
    h1 = jnp.dot(x, w1_ref[...], preferred_element_type=jnp.float32) + b1_ref[...]
    h1 = jnp.maximum(h1, 0.0)
    # Layer 2
    h2 = jnp.dot(h1.astype(jnp.bfloat16), w2_ref[...],
                 preferred_element_type=jnp.float32) + b2_ref[...]
    h2 = jnp.maximum(h2, 0.0)
    # Layer 3 + tanh (EUP)
    h3 = jnp.dot(h2.astype(jnp.bfloat16), w3_ref[...],
                 preferred_element_type=jnp.float32) + b3_ref[...]
    out_ref[...] = jnp.tanh(h3).astype(out_ref.dtype)


def init_actor_params(key, state_size, action_size):
    """f32, unpadded parameters mirroring the PyTorch reset_parameters().

    hidden_init() in the reference uses weight.size()[0] == out_features, so
    fc1 lim = 1/sqrt(400), fc2 lim = 1/sqrt(300); fc3 uses +/-0.003. Biases
    keep PyTorch's default Linear init: U(-1/sqrt(fan_in), 1/sqrt(fan_in)).
    """
    k = jax.random.split(key, 6)
    fc1, fc2 = FC_UNITS

    lim1 = 1.0 / jnp.sqrt(jnp.float32(fc1))
    lim2 = 1.0 / jnp.sqrt(jnp.float32(fc2))
    lim3 = 0.003

    w1 = jax.random.uniform(k[0], (state_size, fc1), jnp.float32, -lim1, lim1)
    w2 = jax.random.uniform(k[1], (fc1, fc2), jnp.float32, -lim2, lim2)
    w3 = jax.random.uniform(k[2], (fc2, action_size), jnp.float32, -lim3, lim3)

    blim1 = 1.0 / jnp.sqrt(jnp.float32(state_size))
    blim2 = 1.0 / jnp.sqrt(jnp.float32(fc1))
    blim3 = 1.0 / jnp.sqrt(jnp.float32(fc2))
    b1 = jax.random.uniform(k[3], (1, fc1), jnp.float32, -blim1, blim1)
    b2 = jax.random.uniform(k[4], (1, fc2), jnp.float32, -blim2, blim2)
    b3 = jax.random.uniform(k[5], (1, action_size), jnp.float32, -blim3, blim3)

    return (w1, b1, w2, b2, w3, b3)


def prepare_params(params_f32):
    """Zero-pad hidden/action dims to lane multiples of 128; cast weights to bf16.

    Zero padding leaves the math unchanged (relu(0)=0, tanh(0)=0); padded
    output lanes are sliced off in the wrapper. Biases stay f32.
    (Contraction dim of layer 1 -- state_size -- is deliberately NOT padded:
    padding K buys nothing on the MXU.)
    """
    w1, b1, w2, b2, w3, b3 = params_f32
    s, f1 = w1.shape
    f2 = w2.shape[1]
    a = w3.shape[1]
    h1p = _round_up(f1, _LANE)     # 400 -> 512
    h2p = _round_up(f2, _LANE)     # 300 -> 384
    ap = _round_up(a, _LANE)       # action_size -> 128 (lane-dense output store)

    w1p = jnp.zeros((s, h1p), jnp.bfloat16).at[:, :f1].set(w1.astype(jnp.bfloat16))
    b1p = jnp.zeros((1, h1p), jnp.float32).at[:, :f1].set(b1)
    w2p = jnp.zeros((h1p, h2p), jnp.bfloat16).at[:f1, :f2].set(w2.astype(jnp.bfloat16))
    b2p = jnp.zeros((1, h2p), jnp.float32).at[:, :f2].set(b2)
    w3p = jnp.zeros((h2p, ap), jnp.bfloat16).at[:f2, :a].set(w3.astype(jnp.bfloat16))
    b3p = jnp.zeros((1, ap), jnp.float32).at[:, :a].set(b3)
    return (w1p, b1p, w2p, b2p, w3p, b3p)


def actor_forward(state, packed_params, action_size, *, block_batch=1024):
    """Fused Actor forward pass on TPU via Pallas.

    `state`: (B, state_size) f32. `packed_params`: output of prepare_params().
    The batch is split into n_tiles tiles of tb rows each; weights stay
    VMEM-resident (constant index_map, single-buffered) while state/output
    tiles are pipelined.
    """
    w1, b1, w2, b2, w3, b3 = packed_params
    B, S = state.shape
    H1 = w1.shape[1]
    H2 = w2.shape[1]
    AP = w3.shape[1]

    # ---- batch tiling ----------------------------------------------------
    #  * at least 2 tiles whenever B allows it, so dimension_semantics
    #    ("parallel",) can shard the grid across both v7x TensorCores;
    #  * tb = ceil(B / n_tiles) rounded up to 16 -> padding waste <= 15 rows
    #    per tile (never the near-2x blowup of round_up(B, fixed_tile));
    #  * tb capped so tiles + intermediates + resident weights stay well
    #    inside every generation's VMEM budget.
    block_batch = max(_BATCH_ALIGN, int(block_batch))
    n_tiles = max(_cdiv(B, block_batch), 2 if B >= 2 * _BATCH_ALIGN else 1)
    tb = min(_round_up(_cdiv(B, n_tiles), _BATCH_ALIGN), _MAX_TB)
    n_tiles = _cdiv(B, tb)
    b_pad = n_tiles * tb
    if b_pad != B:
        # Pad is at most ~16*n_tiles rows by construction; rows are
        # independent and padded output rows are sliced off below.
        state = jnp.pad(state, ((0, b_pad - B), (0, 0)))

    grid = (n_tiles,)

    # ---- cost / VMEM bookkeeping ------------------------------------------
    weight_bytes = ((w1.size + w2.size + w3.size) * 2          # bf16 weights
                    + (b1.size + b2.size + b3.size) * 4)       # f32 biases
    # double-buffered state+out tiles + f32/bf16 h1/h2/h3 intermediates
    row_bytes = 2 * 4 * (S + AP) + 6 * H1 + 6 * H2 + 4 * AP
    vmem_est = weight_bytes + tb * row_bytes
    # Never lower than any chip's default scoped limit (32 MiB); stay safely
    # under v7x's 64 MiB physical VMEM.
    vmem_limit = int(min(max(vmem_est * 3 // 2 + (2 << 20), 32 << 20), 48 << 20))

    flops = 2 * b_pad * (S * H1 + H1 * H2 + H2 * AP)
    bytes_accessed = (weight_bytes
                      + b_pad * S * 4      # state in
                      + b_pad * AP * 4)    # output
    transcendentals = b_pad * AP           # tanh

    # Weights/biases: constant index_map -> fetched once; single-buffered so
    # no VMEM is wasted on a second copy that is never filled.
    resident = dict(pipeline_mode=pl.Buffered(1))

    out = pl.pallas_call(
        _actor_kernel,
        out_shape=jax.ShapeDtypeStruct((b_pad, AP), jnp.float32),
        grid=grid,
        in_specs=[
            pl.BlockSpec((tb, S), lambda i: (i, 0)),              # state: streams
            pl.BlockSpec((S, H1), lambda i: (0, 0), **resident),  # weights/biases:
            pl.BlockSpec((1, H1), lambda i: (0, 0), **resident),  #   VMEM-resident
            pl.BlockSpec((H1, H2), lambda i: (0, 0), **resident),
            pl.BlockSpec((1, H2), lambda i: (0, 0), **resident),
            pl.BlockSpec((H2, AP), lambda i: (0, 0), **resident),
            pl.BlockSpec((1, AP), lambda i: (0, 0), **resident),
        ],
        out_specs=pl.BlockSpec((tb, AP), lambda i: (i, 0)),
        compiler_params=pltpu.CompilerParams(
            dimension_semantics=("parallel",),       # megacore sharding on v7x
            vmem_limit_bytes=vmem_limit,
        ),
        cost_estimate=pl.CostEstimate(
            flops=flops,
            transcendentals=transcendentals,
            bytes_accessed=bytes_accessed,
        ),
    )(state, w1, b1, w2, b2, w3, b3)

    return out[:B, :action_size]


if __name__ == "__main__":
    key = jax.random.PRNGKey(0)
    k_param, k_state = jax.random.split(key)

    batch = 50            # deliberately not a multiple of the tile (exercises padding)
    state_size = 32
    action_size = 8

    params_f32 = init_actor_params(k_param, state_size, action_size)
    packed = prepare_params(params_f32)
    state = jax.random.normal(k_state, (batch, state_size), jnp.float32)

    # Reference in pure f32 JAX (same params, unpadded). bf16 weights and
    # activations in the kernel give ~1e-2-level deviation -> loose tolerance.
    w1, b1, w2, b2, w3, b3 = params_f32
    ref = jnp.tanh(
        jnp.maximum(jnp.maximum(state @ w1 + b1, 0.0) @ w2 + b2, 0.0) @ w3 + b3
    )

    # Default tiling: 50 rows -> 2 tiles of 32 (grid=(2,), both v7x TCs active).
    out = jax.block_until_ready(actor_forward(state, packed, action_size))
    assert out.shape == (batch, action_size)
    assert jnp.allclose(out, ref, atol=2e-2, rtol=2e-2), float(
        jnp.max(jnp.abs(out - ref))
    )

    # Small tile: exercises a 4-step pipelined grid with padding (50 -> 64 rows).
    out2 = jax.block_until_ready(
        actor_forward(state, packed, action_size, block_batch=16)
    )
    assert out2.shape == (batch, action_size)
    assert jnp.allclose(out2, ref, atol=2e-2, rtol=2e-2), float(
        jnp.max(jnp.abs(out2 - ref))
    )

    print("KERNEL_OK")
</pallas_src>

<mosaic_0001>
module attributes {stable_mosaic.version = 11 : i64} {
  func.func @_actor_kernel(%arg0: i32, %arg1: memref<32x32xf32, #tpu.memory_space<vmem>>, %arg2: memref<32x512xbf16, #tpu.memory_space<vmem>>, %arg3: memref<1x512xf32, #tpu.memory_space<vmem>>, %arg4: memref<512x384xbf16, #tpu.memory_space<vmem>>, %arg5: memref<1x384xf32, #tpu.memory_space<vmem>>, %arg6: memref<384x128xbf16, #tpu.memory_space<vmem>>, %arg7: memref<1x128xf32, #tpu.memory_space<vmem>>, %arg8: memref<32x128xf32, #tpu.memory_space<vmem>>) attributes {dimension_semantics = [#tpu.dimension_semantics<parallel>], iteration_bounds = array<i64: 2>, scalar_prefetch = 0 : i64, scratch_operands = 0 : i64, tpu.core_type = #tpu.core_type<tc>, window_params = [{transform_indices = @transform_0, window_bounds = array<i64: 32, 32>}, {pipeline_mode = #tpu.pipeline_mode<synchronous>, transform_indices = @transform_1, window_bounds = array<i64: 32, 512>}, {pipeline_mode = #tpu.pipeline_mode<synchronous>, transform_indices = @transform_2, window_bounds = array<i64: 1, 512>}, {pipeline_mode = #tpu.pipeline_mode<synchronous>, transform_indices = @transform_3, window_bounds = array<i64: 512, 384>}, {pipeline_mode = #tpu.pipeline_mode<synchronous>, transform_indices = @transform_4, window_bounds = array<i64: 1, 384>}, {pipeline_mode = #tpu.pipeline_mode<synchronous>, transform_indices = @transform_5, window_bounds = array<i64: 384, 128>}, {pipeline_mode = #tpu.pipeline_mode<synchronous>, transform_indices = @transform_6, window_bounds = array<i64: 1, 128>}, {transform_indices = @transform_7, window_bounds = array<i64: 32, 128>}]} {
    %c0 = arith.constant 0 : index
    %c0_0 = arith.constant 0 : index
    %0 = vector.load %arg1[%c0, %c0_0] : memref<32x32xf32, #tpu.memory_space<vmem>>, vector<32x32xf32>
    %1 = arith.truncf %0 : vector<32x32xf32> to vector<32x32xbf16>
    %c0_1 = arith.constant 0 : index
    %c0_2 = arith.constant 0 : index
    %2 = vector.load %arg2[%c0_1, %c0_2] : memref<32x512xbf16, #tpu.memory_space<vmem>>, vector<32x512xbf16>
    %cst = arith.constant dense<0.000000e+00> : vector<32x512xf32>
    %3 = tpu.matmul %1, %2, %cst {dimension_numbers = #tpu.dot_dimension_numbers<[1], [0], [0], [1], [0, 0, 1, 1], [], []>} : vector<32x32xbf16>, vector<32x512xbf16>, vector<32x512xf32> -> vector<32x512xf32>
    %c0_3 = arith.constant 0 : index
    %c0_4 = arith.constant 0 : index
    %4 = vector.load %arg3[%c0_3, %c0_4] : memref<1x512xf32, #tpu.memory_space<vmem>>, vector<1x512xf32>
    %5 = vector.broadcast %4 : vector<1x512xf32> to vector<32x512xf32>
    %6 = arith.addf %3, %5 : vector<32x512xf32>
    %cst_5 = arith.constant 0.000000e+00 : f32
    %7 = vector.broadcast %cst_5 : f32 to vector<32x512xf32>
    %8 = arith.maximumf %6, %7 : vector<32x512xf32>
    %9 = arith.truncf %8 : vector<32x512xf32> to vector<32x512xbf16>
    %c0_6 = arith.constant 0 : index
    %c0_7 = arith.constant 0 : index
    %10 = vector.load %arg4[%c0_6, %c0_7] : memref<512x384xbf16, #tpu.memory_space<vmem>>, vector<512x384xbf16>
    %cst_8 = arith.constant dense<0.000000e+00> : vector<32x384xf32>
    %11 = tpu.matmul %9, %10, %cst_8 {dimension_numbers = #tpu.dot_dimension_numbers<[1], [0], [0], [1], [0, 0, 1, 1], [], []>} : vector<32x512xbf16>, vector<512x384xbf16>, vector<32x384xf32> -> vector<32x384xf32>
    %c0_9 = arith.constant 0 : index
    %c0_10 = arith.constant 0 : index
    %12 = vector.load %arg5[%c0_9, %c0_10] : memref<1x384xf32, #tpu.memory_space<vmem>>, vector<1x384xf32>
    %13 = vector.broadcast %12 : vector<1x384xf32> to vector<32x384xf32>
    %14 = arith.addf %11, %13 : vector<32x384xf32>
    %cst_11 = arith.constant 0.000000e+00 : f32
    %15 = vector.broadcast %cst_11 : f32 to vector<32x384xf32>
    %16 = arith.maximumf %14, %15 : vector<32x384xf32>
    %17 = arith.truncf %16 : vector<32x384xf32> to vector<32x384xbf16>
    %c0_12 = arith.constant 0 : index
    %c0_13 = arith.constant 0 : index
    %18 = vector.load %arg6[%c0_12, %c0_13] : memref<384x128xbf16, #tpu.memory_space<vmem>>, vector<384x128xbf16>
    %cst_14 = arith.constant dense<0.000000e+00> : vector<32x128xf32>
    %19 = tpu.matmul %17, %18, %cst_14 {dimension_numbers = #tpu.dot_dimension_numbers<[1], [0], [0], [1], [0, 0, 1, 1], [], []>} : vector<32x384xbf16>, vector<384x128xbf16>, vector<32x128xf32> -> vector<32x128xf32>
    %c0_15 = arith.constant 0 : index
    %c0_16 = arith.constant 0 : index
    %20 = vector.load %arg7[%c0_15, %c0_16] : memref<1x128xf32, #tpu.memory_space<vmem>>, vector<1x128xf32>
    %21 = vector.broadcast %20 : vector<1x128xf32> to vector<32x128xf32>
    %22 = arith.addf %19, %21 : vector<32x128xf32>
    %23 = math.tanh %22 : vector<32x128xf32>
    %c0_17 = arith.constant 0 : index
    %c0_18 = arith.constant 0 : index
    %24 = vector.load %arg8[%c0_17, %c0_18] : memref<32x128xf32, #tpu.memory_space<vmem>>, vector<32x128xf32>
    tpu.vector_store %arg8[%c0_17, %c0_18], %23 {strides = array<i32>} : memref<32x128xf32, #tpu.memory_space<vmem>>, vector<32x128xf32>,
    return
  }
  func.func @transform_0(%arg0: i32) -> (i32, i32) {
    %c0_i32 = arith.constant 0 : i32
    %c0_i32_0 = arith.constant 0 : i32
    return %arg0, %c0_i32 : i32, i32
  }
  func.func @transform_1(%arg0: i32) -> (i32, i32) {
    %c0_i32 = arith.constant 0 : i32
    %c0_i32_0 = arith.constant 0 : i32
    %c0_i32_1 = arith.constant 0 : i32
    return %c0_i32, %c0_i32_0 : i32, i32
  }
  func.func @transform_2(%arg0: i32) -> (i32, i32) {
    %c0_i32 = arith.constant 0 : i32
    %c0_i32_0 = arith.constant 0 : i32
    %c0_i32_1 = arith.constant 0 : i32
    return %c0_i32, %c0_i32_0 : i32, i32
  }
  func.func @transform_3(%arg0: i32) -> (i32, i32) {
    %c0_i32 = arith.constant 0 : i32
    %c0_i32_0 = arith.constant 0 : i32
    %c0_i32_1 = arith.constant 0 : i32
    return %c0_i32, %c0_i32_0 : i32, i32
  }
  func.func @transform_4(%arg0: i32) -> (i32, i32) {
    %c0_i32 = arith.constant 0 : i32
    %c0_i32_0 = arith.constant 0 : i32
    %c0_i32_1 = arith.constant 0 : i32
    return %c0_i32, %c0_i32_0 : i32, i32
  }
  func.func @transform_5(%arg0: i32) -> (i32, i32) {
    %c0_i32 = arith.constant 0 : i32
    %c0_i32_0 = arith.constant 0 : i32
    %c0_i32_1 = arith.constant 0 : i32
    return %c0_i32, %c0_i32_0 : i32, i32
  }
  func.func @transform_6(%arg0: i32) -> (i32, i32) {
    %c0_i32 = arith.constant 0 : i32
    %c0_i32_0 = arith.constant 0 : i32
    %c0_i32_1 = arith.constant 0 : i32
    return %c0_i32, %c0_i32_0 : i32, i32
  }
  func.func @transform_7(%arg0: i32) -> (i32, i32) {
    %c0_i32 = arith.constant 0 : i32
    %c0_i32_0 = arith.constant 0 : i32
    return %arg0, %c0_i32 : i32, i32
  }
}

</mosaic_0001>

<llo_original>
// kernel: tpu_custom_call.1
$region0: #{tpu_custom_call.1}
  #allocation0 [shape = 'u32[]', space=smem, size = 0x4, offset = 0x4, fixed_abs, tag = 'smem constant byte address 0x4 - core index']
  #allocation1 [shape = 'u32[144,128]{1,0:T(1,128)}', space=vmem, size = 0x12000, scoped, tag = 'internal scratch']
  %s0 = inlined_call_operand.vmem [shape: f32[64,32], index: 0, kind: input, shape index: {}]
  %s1 = inlined_call_operand.vmem [shape: bf16[32,512], index: 1, kind: input, shape index: {}]
  %s2 = inlined_call_operand.vmem [shape: f32[1,512], index: 2, kind: input, shape index: {}]
  %s3 = inlined_call_operand.hbm [shape: bf16[512,384], index: 3, kind: input, shape index: {}]
  %s4 = inlined_call_operand.vmem [shape: f32[1,384], index: 4, kind: input, shape index: {}]
  %s5 = inlined_call_operand.hbm [shape: bf16[384,128], index: 5, kind: input, shape index: {}]
  %s6 = inlined_call_operand.vmem [shape: f32[1,128], index: 6, kind: input, shape index: {}]
  %s7 = inlined_call_operand.hbm [shape: f32[64,128], index: 7, kind: output, shape index: {}]
  %s8 = sld [smem:[#allocation0]]
  $region69: #{tpu_custom_call.1} parent=0
    _
  %s10 = ssub.s32 1, %s8
  %s11 = scalar_select 0, %s10, %s8
  $region1: #{tpu_custom_call.1} parent=0
    #allocation2 [shape = 'u8[393216]{0}', space=vmem, size = 0x60000, scoped, tag = 'input window, operand 3, single buffered']
    #allocation3 [shape = 's32[2]{0}', space=sflag, size = 0x8, scoped, tag = 'scoped memory for tpu_custom_call.1']
    #allocation4 [shape = 's32[2]{0}', space=sflag, size = 0x8, scoped, tag = 'scoped memory for tpu_custom_call.1']
    #allocation5 [shape = 'u8[98304]{0}', space=vmem, size = 0x18000, scoped, tag = 'input window, operand 5, single buffered']
    #allocation6 [shape = 's32[1]{0}', space=sflag, size = 0x4, scoped, tag = 'scoped memory for tpu_custom_call.1']
    #allocation7 [shape = 'u8[32768]{0}', space=vmem, size = 0x8000, scoped, tag = 'output window, operand 0']
    %12 = vsyncpa [#allocation3], 0
    %13 = vsyncpa [#allocation6], 0
    %14 = vsyncpa [#allocation4], 0
    %s15 = scalar_lea.sflag [#allocation4], 1
    %16 = vsyncpa %s15, 0
    loop: start=0, step=1, limit=4
    $region2: #{tpu_custom_call.1} parent=1 // loop_pre_header
      _
    $region3: #{tpu_custom_call.1} parent=1 // loop_header
      %s18 = sphi 0, %s22
      %p19 = scmp.ge.s32.totalorder %s18, 4
      %s28 = sphi 0, %s30
      %s31 = sphi 0, %s28
      %s32 = sphi 0, %s31
      %s48 = sphi 0, %s32
      %s52 = sphi 0, %s52
      %s54 = sphi 0, %s52
      %s55 = sphi 0, %s54
      %s69 = sphi 0, %s55
      %s73 = sphi 0, %s73
      %s75 = sphi 0, %s73
      %s76 = sphi 0, %s75
      %s90 = sphi 0, %s76
      %s94 = sphi 0, %s94
      %s96 = sphi 0, %s94
      %s97 = sphi 0, %s96
      %s111 = sphi 0, %s97
      %s115 = sphi 0, %s115
      %s117 = sphi 0, %s115
      %s118 = sphi 0, %s117
      %s132 = sphi 0, %s118
      %s136 = sphi 0, %s136
      %s138 = sphi 0, %s136
      %s139 = sphi 0, %s138
      %s153 = sphi 0, %s139
      %s157 = sphi 0, %s157
      %s159 = sphi 0, %s157
      %s160 = sphi 0, %s159
      %s174 = sphi 0, %s160
      %s180 = sphi 0, %s182
      %s183 = sphi 0, %s180
      %s184 = sphi 0, %s183
      %s200 = sphi 0, %s184
    $region4: #{tpu_custom_call.1} parent=1 // loop_header_branch
      %21 = sbr.rel (%p19) target = $region8
    $region5: #{tpu_custom_call.1} parent=1 // loop_body
      %s23 = ssub.s32 %s18, 1
      %s24 = ssub.s32 %s18, 2
      %s25 = sadd.s32 %s18, 1
      %s26 = ssub.s32 %s18, %s25
      %p27 = scmp.eq.s32.totalorder %s26, 0
      %s29 = sadd.s32 %s28, 1
      %s30 = scalar_select %p27, %s28, %s29
      %p33 = pneg %p27
      %p34 = scmp.eq.s32.totalorder %s18, 1
      %p35 = por %p33, %p34
      %p36 = scmp.ne.s32.totalorder %s28, %s31
      %p37 = scmp.eq.s32.totalorder %s18, 0
      %p38 = por %p36, %p37
      %p39 = scmp.ne.s32.totalorder %s28, %s31
      %p40 = scmp.eq.s32.totalorder %s23, 1
      %p41 = por %p39, %p40
      %p42 = scmp.ne.s32.totalorder %s31, %s32
      %p43 = scmp.eq.s32.totalorder %s23, 0
      %p44 = por %p42, %p43
      %p45 = scmp.ne.s32.totalorder %s31, %s32
      %p46 = scmp.eq.s32.totalorder %s24, 1
      %p47 = por %p45, %p46
      %p49 = scmp.ne.s32.totalorder %s32, %s48
      %p50 = scmp.eq.s32.totalorder %s24, 0
      %p51 = por %p49, %p50
      %s53 = sadd.s32 %s52, 1
      %p56 = scmp.eq.s32.totalorder %s18, 1
      %p57 = scmp.ne.s32.totalorder %s52, %s54
      %p58 = scmp.eq.s32.totalorder %s18, 0
      %p59 = por %p57, %p58
      %p60 = scmp.ne.s32.totalorder %s52, %s54
      %p61 = scmp.eq.s32.totalorder %s23, 1
      %p62 = por %p60, %p61
      %p63 = scmp.ne.s32.totalorder %s54, %s55
      %p64 = scmp.eq.s32.totalorder %s23, 0
      %p65 = por %p63, %p64
      %p66 = scmp.ne.s32.totalorder %s54, %s55
      %p67 = scmp.eq.s32.totalorder %s24, 1
      %p68 = por %p66, %p67
      %p70 = scmp.ne.s32.totalorder %s55, %s69
      %p71 = scmp.eq.s32.totalorder %s24, 0
      %p72 = por %p70, %p71
      %s74 = sadd.s32 %s73, 1
      %p77 = scmp.eq.s32.totalorder %s18, 1
      %p78 = scmp.ne.s32.totalorder %s73, %s75
      %p79 = scmp.eq.s32.totalorder %s18, 0
      %p80 = por %p78, %p79
      %p81 = scmp.ne.s32.totalorder %s73, %s75
      %p82 = scmp.eq.s32.totalorder %s23, 1
      %p83 = por %p81, %p82
      %p84 = scmp.ne.s32.totalorder %s75, %s76
      %p85 = scmp.eq.s32.totalorder %s23, 0
      %p86 = por %p84, %p85
      %p87 = scmp.ne.s32.totalorder %s75, %s76
      %p88 = scmp.eq.s32.totalorder %s24, 1
      %p89 = por %p87, %p88
      %p91 = scmp.ne.s32.totalorder %s76, %s90
      %p92 = scmp.eq.s32.totalorder %s24, 0
      %p93 = por %p91, %p92
      %s95 = sadd.s32 %s94, 1
      %p98 = scmp.eq.s32.totalorder %s18, 1
      %p99 = scmp.ne.s32.totalorder %s94, %s96
      %p100 = scmp.eq.s32.totalorder %s18, 0
      %p101 = por %p99, %p100
      %p102 = scmp.ne.s32.totalorder %s94, %s96
      %p103 = scmp.eq.s32.totalorder %s23, 1
      %p104 = por %p102, %p103
      %p105 = scmp.ne.s32.totalorder %s96, %s97
      %p106 = scmp.eq.s32.totalorder %s23, 0
      %p107 = por %p105, %p106
      %p108 = scmp.ne.s32.totalorder %s96, %s97
      %p109 = scmp.eq.s32.totalorder %s24, 1
      %p110 = por %p108, %p109
      %p112 = scmp.ne.s32.totalorder %s97, %s111
      %p113 = scmp.eq.s32.totalorder %s24, 0
      %p114 = por %p112, %p113
      %s116 = sadd.s32 %s115, 1
      %p119 = scmp.eq.s32.totalorder %s18, 1
      %p120 = scmp.ne.s32.totalorder %s115, %s117
      %p121 = scmp.eq.s32.totalorder %s18, 0
      %p122 = por %p120, %p121
      %p123 = scmp.ne.s32.totalorder %s115, %s117
      %p124 = scmp.eq.s32.totalorder %s23, 1
      %p125 = por %p123, %p124
      %p126 = scmp.ne.s32.totalorder %s117, %s118
      %p127 = scmp.eq.s32.totalorder %s23, 0
      %p128 = por %p126, %p127
      %p129 = scmp.ne.s32.totalorder %s117, %s118
      %p130 = scmp.eq.s32.totalorder %s24, 1
      %p131 = por %p129, %p130
      %p133 = scmp.ne.s32.totalorder %s118, %s132
      %p134 = scmp.eq.s32.totalorder %s24, 0
      %p135 = por %p133, %p134
      %s137 = sadd.s32 %s136, 1
      %p140 = scmp.eq.s32.totalorder %s18, 1
      %p141 = scmp.ne.s32.totalorder %s136, %s138
      %p142 = scmp.eq.s32.totalorder %s18, 0
      %p143 = por %p141, %p142
      %p144 = scmp.ne.s32.totalorder %s136, %s138
      %p145 = scmp.eq.s32.totalorder %s23, 1
      %p146 = por %p144, %p145
      %p147 = scmp.ne.s32.totalorder %s138, %s139
      %p148 = scmp.eq.s32.totalorder %s23, 0
      %p149 = por %p147, %p148
      %p150 = scmp.ne.s32.totalorder %s138, %s139
      %p151 = scmp.eq.s32.totalorder %s24, 1
      %p152 = por %p150, %p151
      %p154 = scmp.ne.s32.totalorder %s139, %s153
      %p155 = scmp.eq.s32.totalorder %s24, 0
      %p156 = por %p154, %p155
      %s158 = sadd.s32 %s157, 1
      %p161 = scmp.eq.s32.totalorder %s18, 1
      %p162 = scmp.ne.s32.totalorder %s157, %s159
      %p163 = scmp.eq.s32.totalorder %s18, 0
      %p164 = por %p162, %p163
      %p165 = scmp.ne.s32.totalorder %s157, %s159
      %p166 = scmp.eq.s32.totalorder %s23, 1
      %p167 = por %p165, %p166
      %p168 = scmp.ne.s32.totalorder %s159, %s160
      %p169 = scmp.eq.s32.totalorder %s23, 0
      %p170 = por %p168, %p169
      %p171 = scmp.ne.s32.totalorder %s159, %s160
      %p172 = scmp.eq.s32.totalorder %s24, 1
      %p173 = por %p171, %p172
      %p175 = scmp.ne.s32.totalorder %s160, %s174
      %p176 = scmp.eq.s32.totalorder %s24, 0
      %p177 = por %p175, %p176
      %s178 = ssub.s32 %s18, %s25
      %p179 = scmp.eq.s32.totalorder %s178, 0
      %s181 = sadd.s32 %s180, 1
      %s182 = scalar_select %p179, %s180, %s181
      %p185 = pneg %p179
      %p186 = scmp.eq.s32.totalorder %s18, 1
      %p187 = por %p185, %p186
      %p188 = scmp.ne.s32.totalorder %s180, %s183
      %p189 = scmp.eq.s32.totalorder %s18, 0
      %p190 = por %p188, %p189
      %p191 = scmp.ne.s32.totalorder %s180, %s183
      %p192 = scmp.eq.s32.totalorder %s23, 1
      %p193 = por %p191, %p192
      %p194 = scmp.ne.s32.totalorder %s183, %s184
      %p195 = scmp.eq.s32.totalorder %s23, 0
      %p196 = por %p194, %p195
      %p197 = scmp.ne.s32.totalorder %s183, %s184
      %p198 = scmp.eq.s32.totalorder %s24, 1
      %p199 = por %p197, %p198
      %p201 = scmp.ne.s32.totalorder %s184, %s200
      %p202 = scmp.eq.s32.totalorder %s24, 0
      %p203 = por %p201, %p202
      %p204 = scmp.le.s32.totalorder 1, %s18
      %p205 = scmp.lt.s32.totalorder %s18, 3
      %p206 = pnand %p204, %p205
      %p207 = pneg %p206
      // Predicated region
      $region9: #{tpu_custom_call.1} parent=5 // pred_check
        _
      $region10: #{tpu_custom_call.1} parent=5 // pred_check_branch
        %209 = sbr.rel (%p206) target = $region12
      $region11: #{tpu_custom_call.1} parent=5 // pred_region
        %s210 = ssub.s32 %s18, 1
        // Predicated region
        $region13: #{tpu_custom_call.1} parent=11 // pred_check
          %p211 = pneg %p65
        $region14: #{tpu_custom_call.1} parent=11 // pred_check_branch
          %213 = sbr.rel (%p211) target = $region16
        $region15: #{tpu_custom_call.1} parent=11 // pred_region
          _
        $region16: #{tpu_custom_call.1} parent=11 // pred_fallthru
          _
        // Predicated region
        $region17: #{tpu_custom_call.1} parent=11 // pred_check
          %p214 = pneg %p86
        $region18: #{tpu_custom_call.1} parent=11 // pred_check_branch
          %216 = sbr.rel (%p214) target = $region20
        $region19: #{tpu_custom_call.1} parent=11 // pred_region
          _
        $region20: #{tpu_custom_call.1} parent=11 // pred_fallthru
          _
        // Predicated region
        $region21: #{tpu_custom_call.1} parent=11 // pred_check
          %p217 = pneg %p107
        $region22: #{tpu_custom_call.1} parent=11 // pred_check_branch
          %219 = sbr.rel (%p217) target = $region24
        $region23: #{tpu_custom_call.1} parent=11 // pred_region
          %s221 = ssub.s32 12288, 12288
          %222 = vsyncadd [#allocation3], %s221
          %s223 = sshll.u32 [#allocation2], 4
          %s224 = int_to_ptr.vmem [resolvable:$true] %s223
          %229 = dma.hbm_to_vmem [thread:$0]  %s3, 12288, %s224, [#allocation3], 192, 192, 12
        $region24: #{tpu_custom_call.1} parent=11 // pred_fallthru
          _
        // Predicated region
        $region25: #{tpu_custom_call.1} parent=11 // pred_check
          %p230 = pneg %p128
        $region26: #{tpu_custom_call.1} parent=11 // pred_check_branch
          %232 = sbr.rel (%p230) target = $region28
        $region27: #{tpu_custom_call.1} parent=11 // pred_region
          _
        $region28: #{tpu_custom_call.1} parent=11 // pred_fallthru
          _
        // Predicated region
        $region29: #{tpu_custom_call.1} parent=11 // pred_check
          %p233 = pneg %p149
        $region30: #{tpu_custom_call.1} parent=11 // pred_check_branch
          %235 = sbr.rel (%p233) target = $region32
        $region31: #{tpu_custom_call.1} parent=11 // pred_region
          %s237 = ssub.s32 3072, 3072
          %238 = vsyncadd [#allocation6], %s237
          %s239 = sshll.u32 [#allocation5], 4
          %s240 = int_to_ptr.vmem [resolvable:$true] %s239
          %245 = dma.hbm_to_vmem [thread:$0]  %s5, 3072, %s240, [#allocation6], 64, 64, 4
        $region32: #{tpu_custom_call.1} parent=11 // pred_fallthru
          _
        // Predicated region
        $region33: #{tpu_custom_call.1} parent=11 // pred_check
          %p246 = pneg %p170
        $region34: #{tpu_custom_call.1} parent=11 // pred_check_branch
          %248 = sbr.rel (%p246) target = $region36
        $region35: #{tpu_custom_call.1} parent=11 // pred_region
          _
        $region36: #{tpu_custom_call.1} parent=11 // pred_fallthru
          _
      $region12: #{tpu_custom_call.1} parent=5 // pred_fallthru
        _
      %p249 = scmp.lt.s32.totalorder %s18, 2
      // Predicated region
      $region37: #{tpu_custom_call.1} parent=5 // pred_check
        %p250 = pneg %p249
      $region38: #{tpu_custom_call.1} parent=5 // pred_check_branch
        %252 = sbr.rel (%p250) target = $region40
      $region39: #{tpu_custom_call.1} parent=5 // pred_region
        // Predicated region
        $region41: #{tpu_custom_call.1} parent=39 // pred_check
          %p253 = pneg %p38
        $region42: #{tpu_custom_call.1} parent=39 // pred_check_branch
          %255 = sbr.rel (%p253) target = $region44
        $region43: #{tpu_custom_call.1} parent=39 // pred_region
          %s256 = smul.u32 4, %s18
          %p257 = scmp.lt.s32.totalorder %s256, 7
          %s258 = scalar_select %p257, %s256, 7
          %s259 = smul.addr %s258, 8
          %s260 = scalar_lea.vmem %s0, %s259
          %s261 = smul.u32 4, %s18
        $region44: #{tpu_custom_call.1} parent=39 // pred_fallthru
          _
      $region40: #{tpu_custom_call.1} parent=5 // pred_fallthru
        _
      %p262 = scmp.le.s32.totalorder 1, %s18
      %p263 = scmp.lt.s32.totalorder %s18, 3
      %p264 = pnand %p262, %p263
      %p265 = pneg %p264
      // Predicated region
      $region45: #{tpu_custom_call.1} parent=5 // pred_check
        _
      $region46: #{tpu_custom_call.1} parent=5 // pred_check_branch
        %267 = sbr.rel (%p264) target = $region48
      $region47: #{tpu_custom_call.1} parent=5 // pred_region
        %s268 = ssub.s32 %s18, 1
        // Predicated region
        $region49: #{tpu_custom_call.1} parent=47 // pred_check
          %p269 = pneg %p107
        $region50: #{tpu_custom_call.1} parent=47 // pred_check_branch
          %271 = sbr.rel (%p269) target = $region52
        $region51: #{tpu_custom_call.1} parent=47 // pred_region
          %272 = dma.done [#allocation3], 12288
        $region52: #{tpu_custom_call.1} parent=47 // pred_fallthru
          _
        // Predicated region
        $region53: #{tpu_custom_call.1} parent=47 // pred_check
          %p273 = pneg %p149
        $region54: #{tpu_custom_call.1} parent=47 // pred_check_branch
          %275 = sbr.rel (%p273) target = $region56
        $region55: #{tpu_custom_call.1} parent=47 // pred_region
          %276 = dma.done [#allocation6], 3072
        $region56: #{tpu_custom_call.1} parent=47 // pred_fallthru
          _
        %s277 = smul.u32 4, %s23
        %p278 = scmp.lt.s32.totalorder %s277, 7
        %s279 = scalar_select %p278, %s277, 7
        %s280 = smul.addr %s279, 8
        %s281 = scalar_lea.vmem %s0, %s280
        %p282 = pneg %p44
        %p283 = pneg %p41
        %p284 = pneg %p65
        %p285 = pneg %p62
        %p286 = pneg %p86
        %p287 = pneg %p83
        %p288 = pneg %p107
        %p289 = pneg %p104
        %p290 = pneg %p128
        %p291 = pneg %p125
        %p292 = pneg %p149
        %p293 = pneg %p146
        %p294 = pneg %p170
        %p295 = pneg %p167
        %p296 = pneg %p196
        %p297 = pneg %p193
        %s298 = sand.u32 %s183, 1
        %s299 = scalar_lea.sflag [#allocation4], %s298
        %s300 = sand.u32 %s183, 1
        %s301 = smul.addr %s300, 32
        %s302 = scalar_lea.vmem [#allocation7], %s301
        %s303 = smul.u32 4, %s23
        %p304 = scmp.lt.s32.totalorder %s303, 7
        %s305 = scalar_select %p304, %s303, 7
        %s306 = smul.addr %s305, 8
        %s307 = scalar_lea.vmem %s0, %s306
        %s308 = smul.u32 4, %s23
        %s309 = smul.u32 4, %s23
        %v311 = vld [vmem:[%s307] sm:$0xff]
        %v312 = vld [vmem:[%s307 + $0x8] sm:$0xff]
        %v313 = vld [vmem:[%s307 + $0x10] sm:$0xff]
        %v314 = vld [vmem:[%s307 + $0x18] sm:$0xff]
        %v315 = vpack.c.bf16 %v312, %v311
        %v316 = vpack.c.bf16 %v314, %v313
        %v317 = vld [vmem:[%s1] sm:$0xff]
        %v318 = vld [vmem:[%s1 + $0x8] sm:$0xff]
        %v319 = vld [vmem:[%s1 + $0x10] sm:$0xff]
        %v320 = vld [vmem:[%s1 + $0x18] sm:$0xff]
        %v321 = vld [vmem:[%s1 + $0x20] sm:$0xff]
        %v322 = vld [vmem:[%s1 + $0x28] sm:$0xff]
        %v323 = vld [vmem:[%s1 + $0x30] sm:$0xff]
        %v324 = vld [vmem:[%s1 + $0x38] sm:$0xff]
        %v325 = vld [vmem:[%s2] sm:$0xf]
        %v327 = vlaneseq
        %v328 = vshrl.u32 %v327, 7
        %v329 = vsub.s32 0, %v328
        %v330 = vrot.slane %v325, %v329
        %v331 = vlaneseq
        %v332 = vshrl.u32 %v331, 7
        %v333 = vsub.s32 1, %v332
        %v334 = vrot.slane %v325, %v333
        %v335 = vlaneseq
        %v336 = vshrl.u32 %v335, 7
        %v337 = vsub.s32 2, %v336
        %v338 = vrot.slane %v325, %v337
        %v339 = vlaneseq
        %v340 = vshrl.u32 %v339, 7
        %v341 = vsub.s32 3, %v340
        %v342 = vrot.slane %v325, %v341
        %v355 = vunpack.c.l.b16 %v317
        %v356 = vunpack.c.h.b16 %v317
        %v357 = vunpack.c.l.b16 %v318
        %v358 = vunpack.c.h.b16 %v318
        %v359 = vunpack.c.l.b16 %v319
        %v360 = vunpack.c.h.b16 %v319
        %v361 = vunpack.c.l.b16 %v320
        %v362 = vunpack.c.h.b16 %v320
        %v363 = vunpack.c.l.b16 %v321
        %v364 = vunpack.c.h.b16 %v321
        %v365 = vunpack.c.l.b16 %v322
        %v366 = vunpack.c.h.b16 %v322
        %v367 = vunpack.c.l.b16 %v323
        %v368 = vunpack.c.h.b16 %v323
        %v369 = vunpack.c.l.b16 %v324
        %v370 = vunpack.c.h.b16 %v324
        %v371 = vpack.c.b16 %v359, %v355
        %v372 = vpack.c.b16 %v360, %v356
        %v373 = vpack.c.b16 %v361, %v357
        %v374 = vpack.c.b16 %v362, %v358
        %v375 = vpack.c.b16 %v367, %v363
        %v376 = vpack.c.b16 %v368, %v364
        %v377 = vpack.c.b16 %v369, %v365
        %v378 = vpack.c.b16 %v370, %v366
        %vm387 = vcmask 261120
        %v389 = vsel %vm387, %v315, 0
        %v392 = vsel %vm387, %v316, 0
        %394 = vmatprep.subr.bf16.mxu0 0
        %395 = vmatpush1.bf16.msra.mxu0 0
        %396 = vmatprep.subr.bf16.mxu0 0
        %397 = vmatpush1.bf16.msra.mxu0 0
        %398 = vmatprep.subr.bf16.mxu0 0
        %399 = vmatpush1.bf16.msra.mxu0 0
        %400 = vmatprep.subr.bf16.mxu0 0
        %401 = vmatpush1.bf16.msra.mxu0 0
        %402 = vmatprep.subr.bf16.mxu0 0
        %403 = vmatpush1.bf16.msra.mxu0 0
        %404 = vmatprep.subr.bf16.mxu0 0
        %405 = vmatpush1.bf16.msra.mxu0 0
        %406 = vmatprep.subr.bf16.mxu0 %v376
        %407 = vmatpush1.bf16.msra.mxu0 %v375
        %408 = vmatprep.subr.bf16.mxu0 %v372
        %409 = vmatpush1.bf16.msra.mxu0 %v371
        %410 = vmatprep.subr.bf16.mxu0 0
        %411 = vmatpush2.bf16.msra.mxu0 0
        %412 = vmatprep.subr.bf16.mxu0 0
        %413 = vmatpush2.bf16.msra.mxu0 0
        %414 = vmatprep.subr.bf16.mxu0 0
        %415 = vmatpush2.bf16.msra.mxu0 0
        %416 = vmatprep.subr.bf16.mxu0 0
        %417 = vmatpush2.bf16.msra.mxu0 0
        %418 = vmatprep.subr.bf16.mxu0 0
        %419 = vmatpush2.bf16.msra.mxu0 0
        %420 = vmatprep.subr.bf16.mxu0 0
        %421 = vmatpush2.bf16.msra.mxu0 0
        %422 = vmatprep.subr.bf16.mxu0 0
        %423 = vmatpush2.bf16.msra.mxu0 0
        %424 = vmatprep.subr.bf16.mxu0 0
        %425 = vmatpush2.bf16.msra.mxu0 0
        %426 = vmatprep.mubr.bf16.mxu0 0
        %427 = vmatmul.mubr.bf16.gmra.mxu0 %v389
        %v428 = vpop.f32.mrf.mxu0
        %v429 = vadd.f32 %v330, %v428
        %v430 = vpop.f32.mrf.mxu0
        %v431 = vadd.f32 %v334, %v430
        %v432 = vpop.f32.mrf.mxu0
        %v433 = vadd.f32 %v330, %v432
        %v434 = vpop.f32.mrf.mxu0
        %v435 = vadd.f32 %v334, %v434
        %436 = vmatprep.mubr.bf16.mxu0 0
        %437 = vmatmul.mubr.bf16.gmra.mxu0 %v392
        %v438 = vpop.f32.mrf.mxu0
        %v439 = vadd.f32 %v330, %v438
        %v440 = vpop.f32.mrf.mxu0
        %v441 = vadd.f32 %v334, %v440
        %v442 = vpop.f32.mrf.mxu0
        %v443 = vadd.f32 %v330, %v442
        %v444 = vpop.f32.mrf.mxu0
        %v445 = vadd.f32 %v334, %v444
        %446 = vdwg.mxu0
        %447 = vmatprep.subr.bf16.mxu0 0
        %448 = vmatpush1.bf16.msra.mxu0 0
        %449 = vmatprep.subr.bf16.mxu0 0
        %450 = vmatpush1.bf16.msra.mxu0 0
        %451 = vmatprep.subr.bf16.mxu0 0
        %452 = vmatpush1.bf16.msra.mxu0 0
        %453 = vmatprep.subr.bf16.mxu0 0
        %454 = vmatpush1.bf16.msra.mxu0 0
        %455 = vmatprep.subr.bf16.mxu0 0
        %456 = vmatpush1.bf16.msra.mxu0 0
        %457 = vmatprep.subr.bf16.mxu0 0
        %458 = vmatpush1.bf16.msra.mxu0 0
        %459 = vmatprep.subr.bf16.mxu0 %v378
        %460 = vmatpush1.bf16.msra.mxu0 %v377
        %461 = vmatprep.subr.bf16.mxu0 %v374
        %462 = vmatpush1.bf16.msra.mxu0 %v373
        %463 = vmatprep.subr.bf16.mxu0 0
        %464 = vmatpush2.bf16.msra.mxu0 0
        %465 = vmatprep.subr.bf16.mxu0 0
        %466 = vmatpush2.bf16.msra.mxu0 0
        %467 = vmatprep.subr.bf16.mxu0 0
        %468 = vmatpush2.bf16.msra.mxu0 0
        %469 = vmatprep.subr.bf16.mxu0 0
        %470 = vmatpush2.bf16.msra.mxu0 0
        %471 = vmatprep.subr.bf16.mxu0 0
        %472 = vmatpush2.bf16.msra.mxu0 0
        %473 = vmatprep.subr.bf16.mxu0 0
        %474 = vmatpush2.bf16.msra.mxu0 0
        %475 = vmatprep.subr.bf16.mxu0 0
        %476 = vmatpush2.bf16.msra.mxu0 0
        %477 = vmatprep.subr.bf16.mxu0 0
        %478 = vmatpush2.bf16.msra.mxu0 0
        %479 = vmatprep.mubr.bf16.mxu0 0
        %480 = vmatmul.mubr.bf16.gmra.mxu0 %v389
        %v481 = vpop.f32.mrf.mxu0
        %v482 = vadd.f32 %v338, %v481
        %v483 = vpop.f32.mrf.mxu0
        %v484 = vadd.f32 %v342, %v483
        %v485 = vpop.f32.mrf.mxu0
        %v486 = vadd.f32 %v338, %v485
        %v487 = vpop.f32.mrf.mxu0
        %v488 = vadd.f32 %v342, %v487
        %489 = vmatprep.mubr.bf16.mxu0 0
        %490 = vmatmul.mubr.bf16.gmra.mxu0 %v392
        %v491 = vpop.f32.mrf.mxu0
        %v492 = vadd.f32 %v338, %v491
        %v493 = vpop.f32.mrf.mxu0
        %v494 = vadd.f32 %v342, %v493
        %v495 = vpop.f32.mrf.mxu0
        %v496 = vadd.f32 %v338, %v495
        %v497 = vpop.f32.mrf.mxu0
        %v498 = vadd.f32 %v342, %v497
        %499 = vdwg.mxu0
        %v500 = vmax.f32 %v429, 0.0
        %v501 = vmax.f32 %v431, 0.0
        %v502 = vmax.f32 %v482, 0.0
        %v503 = vmax.f32 %v484, 0.0
        %v504 = vmax.f32 %v433, 0.0
        %v505 = vmax.f32 %v435, 0.0
        %v506 = vmax.f32 %v486, 0.0
        %v507 = vmax.f32 %v488, 0.0
        %v508 = vmax.f32 %v439, 0.0
        %v509 = vmax.f32 %v441, 0.0
        %v510 = vmax.f32 %v492, 0.0
        %v511 = vmax.f32 %v494, 0.0
        %v512 = vmax.f32 %v443, 0.0
        %v513 = vmax.f32 %v445, 0.0
        %v514 = vmax.f32 %v496, 0.0
        %v515 = vmax.f32 %v498, 0.0
        %v516 = vpack.c.bf16 %v504, %v500
        %v517 = vpack.c.bf16 %v505, %v501
        %v518 = vpack.c.bf16 %v506, %v502
        %v519 = vpack.c.bf16 %v507, %v503
        %v520 = vpack.c.bf16 %v512, %v508
        %v521 = vpack.c.bf16 %v513, %v509
        %v522 = vpack.c.bf16 %v514, %v510
        %v523 = vpack.c.bf16 %v515, %v511
        %v524 = vld [vmem:[#allocation2] sm:$0xff]
        %v525 = vld [vmem:[#allocation2 + $0x8] sm:$0xf]
        %v526 = vld [vmem:[#allocation2 + $0xc] sm:$0xff]
        %v527 = vld [vmem:[#allocation2 + $0x14] sm:$0xf]
        %v528 = vld [vmem:[#allocation2 + $0x18] sm:$0xff]
        %v529 = vld [vmem:[#allocation2 + $0x20] sm:$0xf]
        %v530 = vld [vmem:[#allocation2 + $0x24] sm:$0xff]
        %v531 = vld [vmem:[#allocation2 + $0x2c] sm:$0xf]
        %v532 = vld [vmem:[#allocation2 + $0x30] sm:$0xff]
        %v533 = vld [vmem:[#allocation2 + $0x38] sm:$0xf]
        %v534 = vld [vmem:[#allocation2 + $0x3c] sm:$0xff]
        %v535 = vld [vmem:[#allocation2 + $0x44] sm:$0xf]
        %v536 = vld [vmem:[#allocation2 + $0x48] sm:$0xff]
        %v537 = vld [vmem:[#allocation2 + $0x50] sm:$0xf]
        %v538 = vld [vmem:[#allocation2 + $0x54] sm:$0xff]
        %v539 = vld [vmem:[#allocation2 + $0x5c] sm:$0xf]
        %v540 = vld [vmem:[#allocation2 + $0x60] sm:$0xff]
        %v541 = vld [vmem:[#allocation2 + $0x68] sm:$0xf]
        %v542 = vld [vmem:[#allocation2 + $0x6c] sm:$0xff]
        %v543 = vld [vmem:[#allocation2 + $0x74] sm:$0xf]
        %v544 = vld [vmem:[#allocation2 + $0x78] sm:$0xff]
        %v545 = vld [vmem:[#allocation2 + $0x80] sm:$0xf]
        %v546 = vld [vmem:[#allocation2 + $0x84] sm:$0xff]
        %v547 = vld [vmem:[#allocation2 + $0x8c] sm:$0xf]
        %v548 = vld [vmem:[#allocation2 + $0x90] sm:$0xff]
        %v549 = vld [vmem:[#allocation2 + $0x98] sm:$0xf]
        %v550 = vld [vmem:[#allocation2 + $0x9c] sm:$0xff]
        %v551 = vld [vmem:[#allocation2 + $0xa4] sm:$0xf]
        %v552 = vld [vmem:[#allocation2 + $0xa8] sm:$0xff]
        %v553 = vld [vmem:[#allocation2 + $0xb0] sm:$0xf]
        %v554 = vld [vmem:[#allocation2 + $0xb4] sm:$0xff]
        %v555 = vld [vmem:[#allocation2 + $0xbc] sm:$0xf]
        %v556 = vld [vmem:[#allocation2 + $0xc0] sm:$0xff]
        %v557 = vld [vmem:[#allocation2 + $0xc8] sm:$0xf]
        %v558 = vld [vmem:[#allocation2 + $0xcc] sm:$0xff]
        %v559 = vld [vmem:[#allocation2 + $0xd4] sm:$0xf]
        %v560 = vld [vmem:[#allocation2 + $0xd8] sm:$0xff]
        %v561 = vld [vmem:[#allocation2 + $0xe0] sm:$0xf]
        %v562 = vld [vmem:[#allocation2 + $0xe4] sm:$0xff]
        %v563 = vld [vmem:[#allocation2 + $0xec] sm:$0xf]
        %v564 = vld [vmem:[#allocation2 + $0xf0] sm:$0xff]
        %v565 = vld [vmem:[#allocation2 + $0xf8] sm:$0xf]
        %v566 = vld [vmem:[#allocation2 + $0xfc] sm:$0xff]
        %v567 = vld [vmem:[#allocation2 + $0x104] sm:$0xf]
        %v568 = vld [vmem:[#allocation2 + $0x108] sm:$0xff]
        %v569 = vld [vmem:[#allocation2 + $0x110] sm:$0xf]
        %v570 = vld [vmem:[#allocation2 + $0x114] sm:$0xff]
        %v571 = vld [vmem:[#allocation2 + $0x11c] sm:$0xf]
        %v572 = vld [vmem:[#allocation2 + $0x120] sm:$0xff]
        %v573 = vld [vmem:[#allocation2 + $0x128] sm:$0xf]
        %v574 = vld [vmem:[#allocation2 + $0x12c] sm:$0xff]
        %v575 = vld [vmem:[#allocation2 + $0x134] sm:$0xf]
        %v576 = vld [vmem:[#allocation2 + $0x138] sm:$0xff]
        %v577 = vld [vmem:[#allocation2 + $0x140] sm:$0xf]
        %v578 = vld [vmem:[#allocation2 + $0x144] sm:$0xff]
        %v579 = vld [vmem:[#allocation2 + $0x14c] sm:$0xf]
        %v580 = vld [vmem:[#allocation2 + $0x150] sm:$0xff]
        %v581 = vld [vmem:[#allocation2 + $0x158] sm:$0xf]
        %v582 = vld [vmem:[#allocation2 + $0x15c] sm:$0xff]
        %v583 = vld [vmem:[#allocation2 + $0x164] sm:$0xf]
        %v584 = vld [vmem:[#allocation2 + $0x168] sm:$0xff]
        %v585 = vld [vmem:[#allocation2 + $0x170] sm:$0xf]
        %v586 = vld [vmem:[#allocation2 + $0x174] sm:$0xff]
        %v587 = vld [vmem:[#allocation2 + $0x17c] sm:$0xf]
        %v588 = vld [vmem:[#allocation2 + $0x180] sm:$0xff]
        %v589 = vld [vmem:[#allocation2 + $0x188] sm:$0xf]
        %v590 = vld [vmem:[#allocation2 + $0x18c] sm:$0xff]
        %v591 = vld [vmem:[#allocation2 + $0x194] sm:$0xf]
        %v592 = vld [vmem:[#allocation2 + $0x198] sm:$0xff]
        %v593 = vld [vmem:[#allocation2 + $0x1a0] sm:$0xf]
        %v594 = vld [vmem:[#allocation2 + $0x1a4] sm:$0xff]
        %v595 = vld [vmem:[#allocation2 + $0x1ac] sm:$0xf]
        %v596 = vld [vmem:[#allocation2 + $0x1b0] sm:$0xff]
        %v597 = vld [vmem:[#allocation2 + $0x1b8] sm:$0xf]
        %v598 = vld [vmem:[#allocation2 + $0x1bc] sm:$0xff]
        %v599 = vld [vmem:[#allocation2 + $0x1c4] sm:$0xf]
        %v600 = vld [vmem:[#allocation2 + $0x1c8] sm:$0xff]
        %v601 = vld [vmem:[#allocation2 + $0x1d0] sm:$0xf]
        %v602 = vld [vmem:[#allocation2 + $0x1d4] sm:$0xff]
        %v603 = vld [vmem:[#allocation2 + $0x1dc] sm:$0xf]
        %v604 = vld [vmem:[#allocation2 + $0x1e0] sm:$0xff]
        %v605 = vld [vmem:[#allocation2 + $0x1e8] sm:$0xf]
        %v606 = vld [vmem:[#allocation2 + $0x1ec] sm:$0xff]
        %v607 = vld [vmem:[#allocation2 + $0x1f4] sm:$0xf]
        %v608 = vld [vmem:[#allocation2 + $0x1f8] sm:$0xff]
        %v609 = vld [vmem:[#allocation2 + $0x200] sm:$0xf]
        %v610 = vld [vmem:[#allocation2 + $0x204] sm:$0xff]
        %v611 = vld [vmem:[#allocation2 + $0x20c] sm:$0xf]
        %v612 = vld [vmem:[#allocation2 + $0x210] sm:$0xff]
        %v613 = vld [vmem:[#allocation2 + $0x218] sm:$0xf]
        %v614 = vld [vmem:[#allocation2 + $0x21c] sm:$0xff]
        %v615 = vld [vmem:[#allocation2 + $0x224] sm:$0xf]
        %v616 = vld [vmem:[#allocation2 + $0x228] sm:$0xff]
        %v617 = vld [vmem:[#allocation2 + $0x230] sm:$0xf]
        %v618 = vld [vmem:[#allocation2 + $0x234] sm:$0xff]
        %v619 = vld [vmem:[#allocation2 + $0x23c] sm:$0xf]
        %v620 = vld [vmem:[#allocation2 + $0x240] sm:$0xff]
        %v621 = vld [vmem:[#allocation2 + $0x248] sm:$0xf]
        %v622 = vld [vmem:[#allocation2 + $0x24c] sm:$0xff]
        %v623 = vld [vmem:[#allocation2 + $0x254] sm:$0xf]
        %v624 = vld [vmem:[#allocation2 + $0x258] sm:$0xff]
        %v625 = vld [vmem:[#allocation2 + $0x260] sm:$0xf]
        %v626 = vld [vmem:[#allocation2 + $0x264] sm:$0xff]
        %v627 = vld [vmem:[#allocation2 + $0x26c] sm:$0xf]
        %v628 = vld [vmem:[#allocation2 + $0x270] sm:$0xff]
        %v629 = vld [vmem:[#allocation2 + $0x278] sm:$0xf]
        %v630 = vld [vmem:[#allocation2 + $0x27c] sm:$0xff]
        %v631 = vld [vmem:[#allocation2 + $0x284] sm:$0xf]
        %v632 = vld [vmem:[#allocation2 + $0x288] sm:$0xff]
        %v633 = vld [vmem:[#allocation2 + $0x290] sm:$0xf]
        %v634 = vld [vmem:[#allocation2 + $0x294] sm:$0xff]
        %v635 = vld [vmem:[#allocation2 + $0x29c] sm:$0xf]
        %v636 = vld [vmem:[#allocation2 + $0x2a0] sm:$0xff]
        %v637 = vld [vmem:[#allocation2 + $0x2a8] sm:$0xf]
        %v638 = vld [vmem:[#allocation2 + $0x2ac] sm:$0xff]
        %v639 = vld [vmem:[#allocation2 + $0x2b4] sm:$0xf]
        %v640 = vld [vmem:[#allocation2 + $0x2b8] sm:$0xff]
        %v641 = vld [vmem:[#allocation2 + $0x2c0] sm:$0xf]
        %v642 = vld [vmem:[#allocation2 + $0x2c4] sm:$0xff]
        %v643 = vld [vmem:[#allocation2 + $0x2cc] sm:$0xf]
        %v644 = vld [vmem:[#allocation2 + $0x2d0] sm:$0xff]
        %v645 = vld [vmem:[#allocation2 + $0x2d8] sm:$0xf]
        %v646 = vld [vmem:[#allocation2 + $0x2dc] sm:$0xff]
        %v647 = vld [vmem:[#allocation2 + $0x2e4] sm:$0xf]
        %v648 = vld [vmem:[#allocation2 + $0x2e8] sm:$0xff]
        %v649 = vld [vmem:[#allocation2 + $0x2f0] sm:$0xf]
        %v650 = vld [vmem:[#allocation2 + $0x2f4] sm:$0xff]
        %v651 = vld [vmem:[#allocation2 + $0x2fc] sm:$0xf]
        %v652 = vld [vmem:[%s4] sm:$0x7]
        %v654 = vlaneseq
        %v655 = vshrl.u32 %v654, 7
        %v656 = vsub.s32 0, %v655
        %v657 = vrot.slane %v652, %v656
        %v658 = vlaneseq
        %v659 = vshrl.u32 %v658, 7
        %v660 = vsub.s32 1, %v659
        %v661 = vrot.slane %v652, %v660
        %v662 = vlaneseq
        %v663 = vshrl.u32 %v662, 7
        %v664 = vsub.s32 2, %v663
        %v665 = vrot.slane %v652, %v664
        %v797 = vunpack.c.l.b16 %v524
        %v798 = vunpack.c.h.b16 %v524
        %v799 = vunpack.c.l.b16 %v525
        %v800 = vunpack.c.l.b16 %v526
        %v801 = vunpack.c.h.b16 %v526
        %v802 = vunpack.c.l.b16 %v527
        %v803 = vunpack.c.l.b16 %v528
        %v804 = vunpack.c.h.b16 %v528
        %v805 = vunpack.c.l.b16 %v529
        %v806 = vunpack.c.l.b16 %v530
        %v807 = vunpack.c.h.b16 %v530
        %v808 = vunpack.c.l.b16 %v531
        %v809 = vunpack.c.l.b16 %v532
        %v810 = vunpack.c.h.b16 %v532
        %v811 = vunpack.c.l.b16 %v533
        %v812 = vunpack.c.l.b16 %v534
        %v813 = vunpack.c.h.b16 %v534
        %v814 = vunpack.c.l.b16 %v535
        %v815 = vunpack.c.l.b16 %v536
        %v816 = vunpack.c.h.b16 %v536
        %v817 = vunpack.c.l.b16 %v537
        %v818 = vunpack.c.l.b16 %v538
        %v819 = vunpack.c.h.b16 %v538
        %v820 = vunpack.c.l.b16 %v539
        %v821 = vunpack.c.l.b16 %v540
        %v822 = vunpack.c.h.b16 %v540
        %v823 = vunpack.c.l.b16 %v541
        %v824 = vunpack.c.l.b16 %v542
        %v825 = vunpack.c.h.b16 %v542
        %v826 = vunpack.c.l.b16 %v543
        %v827 = vunpack.c.l.b16 %v544
        %v828 = vunpack.c.h.b16 %v544
        %v829 = vunpack.c.l.b16 %v545
        %v830 = vunpack.c.l.b16 %v546
        %v831 = vunpack.c.h.b16 %v546
        %v832 = vunpack.c.l.b16 %v547
        %v833 = vunpack.c.l.b16 %v548
        %v834 = vunpack.c.h.b16 %v548
        %v835 = vunpack.c.l.b16 %v549
        %v836 = vunpack.c.l.b16 %v550
        %v837 = vunpack.c.h.b16 %v550
        %v838 = vunpack.c.l.b16 %v551
        %v839 = vunpack.c.l.b16 %v552
        %v840 = vunpack.c.h.b16 %v552
        %v841 = vunpack.c.l.b16 %v553
        %v842 = vunpack.c.l.b16 %v554
        %v843 = vunpack.c.h.b16 %v554
        %v844 = vunpack.c.l.b16 %v555
        %v845 = vunpack.c.l.b16 %v556
        %v846 = vunpack.c.h.b16 %v556
        %v847 = vunpack.c.l.b16 %v557
        %v848 = vunpack.c.l.b16 %v558
        %v849 = vunpack.c.h.b16 %v558
        %v850 = vunpack.c.l.b16 %v559
        %v851 = vunpack.c.l.b16 %v560
        %v852 = vunpack.c.h.b16 %v560
        %v853 = vunpack.c.l.b16 %v561
        %v854 = vunpack.c.l.b16 %v562
        %v855 = vunpack.c.h.b16 %v562
        %v856 = vunpack.c.l.b16 %v563
        %v857 = vunpack.c.l.b16 %v564
        %v858 = vunpack.c.h.b16 %v564
        %v859 = vunpack.c.l.b16 %v565
        %v860 = vunpack.c.l.b16 %v566
        %v861 = vunpack.c.h.b16 %v566
        %v862 = vunpack.c.l.b16 %v567
        %v863 = vunpack.c.l.b16 %v568
        %v864 = vunpack.c.h.b16 %v568
        %v865 = vunpack.c.l.b16 %v569
        %v866 = vunpack.c.l.b16 %v570
        %v867 = vunpack.c.h.b16 %v570
        %v868 = vunpack.c.l.b16 %v571
        %v869 = vunpack.c.l.b16 %v572
        %v870 = vunpack.c.h.b16 %v572
        %v871 = vunpack.c.l.b16 %v573
        %v872 = vunpack.c.l.b16 %v574
        %v873 = vunpack.c.h.b16 %v574
        %v874 = vunpack.c.l.b16 %v575
        %v875 = vunpack.c.l.b16 %v576
        %v876 = vunpack.c.h.b16 %v576
        %v877 = vunpack.c.l.b16 %v577
        %v878 = vunpack.c.l.b16 %v578
        %v879 = vunpack.c.h.b16 %v578
        %v880 = vunpack.c.l.b16 %v579
        %v881 = vunpack.c.l.b16 %v580
        %v882 = vunpack.c.h.b16 %v580
        %v883 = vunpack.c.l.b16 %v581
        %v884 = vunpack.c.l.b16 %v582
        %v885 = vunpack.c.h.b16 %v582
        %v886 = vunpack.c.l.b16 %v583
        %v887 = vunpack.c.l.b16 %v584
        %v888 = vunpack.c.h.b16 %v584
        %v889 = vunpack.c.l.b16 %v585
        %v890 = vunpack.c.l.b16 %v586
        %v891 = vunpack.c.h.b16 %v586
        %v892 = vunpack.c.l.b16 %v587
        %v893 = vunpack.c.l.b16 %v588
        %v894 = vunpack.c.h.b16 %v588
        %v895 = vunpack.c.l.b16 %v589
        %v896 = vunpack.c.l.b16 %v590
        %v897 = vunpack.c.h.b16 %v590
        %v898 = vunpack.c.l.b16 %v591
        %v899 = vunpack.c.l.b16 %v592
        %v900 = vunpack.c.h.b16 %v592
        %v901 = vunpack.c.l.b16 %v593
        %v902 = vunpack.c.l.b16 %v594
        %v903 = vunpack.c.h.b16 %v594
        %v904 = vunpack.c.l.b16 %v595
        %v905 = vunpack.c.l.b16 %v596
        %v906 = vunpack.c.h.b16 %v596
        %v907 = vunpack.c.l.b16 %v597
        %v908 = vunpack.c.l.b16 %v598
        %v909 = vunpack.c.h.b16 %v598
        %v910 = vunpack.c.l.b16 %v599
        %v911 = vunpack.c.l.b16 %v600
        %v912 = vunpack.c.h.b16 %v600
        %v913 = vunpack.c.l.b16 %v601
        %v914 = vunpack.c.l.b16 %v602
        %v915 = vunpack.c.h.b16 %v602
        %v916 = vunpack.c.l.b16 %v603
        %v917 = vunpack.c.l.b16 %v604
        %v918 = vunpack.c.h.b16 %v604
        %v919 = vunpack.c.l.b16 %v605
        %v920 = vunpack.c.l.b16 %v606
        %v921 = vunpack.c.h.b16 %v606
        %v922 = vunpack.c.l.b16 %v607
        %v923 = vunpack.c.l.b16 %v608
        %v924 = vunpack.c.h.b16 %v608
        %v925 = vunpack.c.l.b16 %v609
        %v926 = vunpack.c.l.b16 %v610
        %v927 = vunpack.c.h.b16 %v610
        %v928 = vunpack.c.l.b16 %v611
        %v929 = vunpack.c.l.b16 %v612
        %v930 = vunpack.c.h.b16 %v612
        %v931 = vunpack.c.l.b16 %v613
        %v932 = vunpack.c.l.b16 %v614
        %v933 = vunpack.c.h.b16 %v614
        %v934 = vunpack.c.l.b16 %v615
        %v935 = vunpack.c.l.b16 %v616
        %v936 = vunpack.c.h.b16 %v616
        %v937 = vunpack.c.l.b16 %v617
        %v938 = vunpack.c.l.b16 %v618
        %v939 = vunpack.c.h.b16 %v618
        %v940 = vunpack.c.l.b16 %v619
        %v941 = vunpack.c.l.b16 %v620
        %v942 = vunpack.c.h.b16 %v620
        %v943 = vunpack.c.l.b16 %v621
        %v944 = vunpack.c.l.b16 %v622
        %v945 = vunpack.c.h.b16 %v622
        %v946 = vunpack.c.l.b16 %v623
        %v947 = vunpack.c.l.b16 %v624
        %v948 = vunpack.c.h.b16 %v624
        %v949 = vunpack.c.l.b16 %v625
        %v950 = vunpack.c.l.b16 %v626
        %v951 = vunpack.c.h.b16 %v626
        %v952 = vunpack.c.l.b16 %v627
        %v953 = vunpack.c.l.b16 %v628
        %v954 = vunpack.c.h.b16 %v628
        %v955 = vunpack.c.l.b16 %v629
        %v956 = vunpack.c.l.b16 %v630
        %v957 = vunpack.c.h.b16 %v630
        %v958 = vunpack.c.l.b16 %v631
        %v959 = vunpack.c.l.b16 %v632
        %v960 = vunpack.c.h.b16 %v632
        %v961 = vunpack.c.l.b16 %v633
        %v962 = vunpack.c.l.b16 %v634
        %v963 = vunpack.c.h.b16 %v634
        %v964 = vunpack.c.l.b16 %v635
        %v965 = vunpack.c.l.b16 %v636
        %v966 = vunpack.c.h.b16 %v636
        %v967 = vunpack.c.l.b16 %v637
        %v968 = vunpack.c.l.b16 %v638
        %v969 = vunpack.c.h.b16 %v638
        %v970 = vunpack.c.l.b16 %v639
        %v971 = vunpack.c.l.b16 %v640
        %v972 = vunpack.c.h.b16 %v640
        %v973 = vunpack.c.l.b16 %v641
        %v974 = vunpack.c.l.b16 %v642
        %v975 = vunpack.c.h.b16 %v642
        %v976 = vunpack.c.l.b16 %v643
        %v977 = vunpack.c.l.b16 %v644
        %v978 = vunpack.c.h.b16 %v644
        %v979 = vunpack.c.l.b16 %v645
        %v980 = vunpack.c.l.b16 %v646
        %v981 = vunpack.c.h.b16 %v646
        %v982 = vunpack.c.l.b16 %v647
        %v983 = vunpack.c.l.b16 %v648
        %v984 = vunpack.c.h.b16 %v648
        %v985 = vunpack.c.l.b16 %v649
        %v986 = vunpack.c.l.b16 %v650
        %v987 = vunpack.c.h.b16 %v650
        %v988 = vunpack.c.l.b16 %v651
        %v989 = vpack.c.b16 %v800, %v797
        %v990 = vpack.c.b16 %v801, %v798
        %v991 = vpack.c.b16 %v802, %v799
        %v992 = vpack.c.b16 %v806, %v803
        %v993 = vpack.c.b16 %v807, %v804
        %v994 = vpack.c.b16 %v808, %v805
        %v995 = vpack.c.b16 %v812, %v809
        %v996 = vpack.c.b16 %v813, %v810
        %v997 = vpack.c.b16 %v814, %v811
        %v998 = vpack.c.b16 %v818, %v815
        %v999 = vpack.c.b16 %v819, %v816
        %v1000 = vpack.c.b16 %v820, %v817
        %v1001 = vpack.c.b16 %v824, %v821
        %v1002 = vpack.c.b16 %v825, %v822
        %v1003 = vpack.c.b16 %v826, %v823
        %v1004 = vpack.c.b16 %v830, %v827
        %v1005 = vpack.c.b16 %v831, %v828
        %v1006 = vpack.c.b16 %v832, %v829
        %v1007 = vpack.c.b16 %v836, %v833
        %v1008 = vpack.c.b16 %v837, %v834
        %v1009 = vpack.c.b16 %v838, %v835
        %v1010 = vpack.c.b16 %v842, %v839
        %v1011 = vpack.c.b16 %v843, %v840
        %v1012 = vpack.c.b16 %v844, %v841
        %v1013 = vpack.c.b16 %v848, %v845
        %v1014 = vpack.c.b16 %v849, %v846
        %v1015 = vpack.c.b16 %v850, %v847
        %v1016 = vpack.c.b16 %v854, %v851
        %v1017 = vpack.c.b16 %v855, %v852
        %v1018 = vpack.c.b16 %v856, %v853
        %v1019 = vpack.c.b16 %v860, %v857
        %v1020 = vpack.c.b16 %v861, %v858
        %v1021 = vpack.c.b16 %v862, %v859
        %v1022 = vpack.c.b16 %v866, %v863
        %v1023 = vpack.c.b16 %v867, %v864
        %v1024 = vpack.c.b16 %v868, %v865
        %v1025 = vpack.c.b16 %v872, %v869
        %v1026 = vpack.c.b16 %v873, %v870
        %v1027 = vpack.c.b16 %v874, %v871
        %v1028 = vpack.c.b16 %v878, %v875
        %v1029 = vpack.c.b16 %v879, %v876
        %v1030 = vpack.c.b16 %v880, %v877
        %v1031 = vpack.c.b16 %v884, %v881
        %v1032 = vpack.c.b16 %v885, %v882
        %v1033 = vpack.c.b16 %v886, %v883
        %v1034 = vpack.c.b16 %v890, %v887
        %v1035 = vpack.c.b16 %v891, %v888
        %v1036 = vpack.c.b16 %v892, %v889
        %v1037 = vpack.c.b16 %v896, %v893
        %v1038 = vpack.c.b16 %v897, %v894
        %v1039 = vpack.c.b16 %v898, %v895
        %v1040 = vpack.c.b16 %v902, %v899
        %v1041 = vpack.c.b16 %v903, %v900
        %v1042 = vpack.c.b16 %v904, %v901
        %v1043 = vpack.c.b16 %v908, %v905
        %v1044 = vpack.c.b16 %v909, %v906
        %v1045 = vpack.c.b16 %v910, %v907
        %v1046 = vpack.c.b16 %v914, %v911
        %v1047 = vpack.c.b16 %v915, %v912
        %v1048 = vpack.c.b16 %v916, %v913
        %v1049 = vpack.c.b16 %v920, %v917
        %v1050 = vpack.c.b16 %v921, %v918
        %v1051 = vpack.c.b16 %v922, %v919
        %v1052 = vpack.c.b16 %v926, %v923
        %v1053 = vpack.c.b16 %v927, %v924
        %v1054 = vpack.c.b16 %v928, %v925
        %v1055 = vpack.c.b16 %v932, %v929
        %v1056 = vpack.c.b16 %v933, %v930
        %v1057 = vpack.c.b16 %v934, %v931
        %v1058 = vpack.c.b16 %v938, %v935
        %v1059 = vpack.c.b16 %v939, %v936
        %v1060 = vpack.c.b16 %v940, %v937
        %v1061 = vpack.c.b16 %v944, %v941
        %v1062 = vpack.c.b16 %v945, %v942
        %v1063 = vpack.c.b16 %v946, %v943
        %v1064 = vpack.c.b16 %v950, %v947
        %v1065 = vpack.c.b16 %v951, %v948
        %v1066 = vpack.c.b16 %v952, %v949
        %v1067 = vpack.c.b16 %v956, %v953
        %v1068 = vpack.c.b16 %v957, %v954
        %v1069 = vpack.c.b16 %v958, %v955
        %v1070 = vpack.c.b16 %v962, %v959
        %v1071 = vpack.c.b16 %v963, %v960
        %v1072 = vpack.c.b16 %v964, %v961
        %v1073 = vpack.c.b16 %v968, %v965
        %v1074 = vpack.c.b16 %v969, %v966
        %v1075 = vpack.c.b16 %v970, %v967
        %v1076 = vpack.c.b16 %v974, %v971
        %v1077 = vpack.c.b16 %v975, %v972
        %v1078 = vpack.c.b16 %v976, %v973
        %v1079 = vpack.c.b16 %v980, %v977
        %v1080 = vpack.c.b16 %v981, %v978
        %v1081 = vpack.c.b16 %v982, %v979
        %v1082 = vpack.c.b16 %v986, %v983
        %v1083 = vpack.c.b16 %v987, %v984
        %v1084 = vpack.c.b16 %v988, %v985
        %1181 = vmatprep.subr.bf16.mxu0 %v1011
        %1182 = vmatpush1.bf16.msra.mxu0 %v1010
        %1183 = vmatprep.subr.bf16.mxu0 %v1008
        %1184 = vmatpush1.bf16.msra.mxu0 %v1007
        %1185 = vmatprep.subr.bf16.mxu0 %v1005
        %1186 = vmatpush1.bf16.msra.mxu0 %v1004
        %1187 = vmatprep.subr.bf16.mxu0 %v1002
        %1188 = vmatpush1.bf16.msra.mxu0 %v1001
        %1189 = vmatprep.subr.bf16.mxu0 %v999
        %1190 = vmatpush1.bf16.msra.mxu0 %v998
        %1191 = vmatprep.subr.bf16.mxu0 %v996
        %1192 = vmatpush1.bf16.msra.mxu0 %v995
        %1193 = vmatprep.subr.bf16.mxu0 %v993
        %1194 = vmatpush1.bf16.msra.mxu0 %v992
        %1195 = vmatprep.subr.bf16.mxu0 %v990
        %1196 = vmatpush1.bf16.msra.mxu0 %v989
        %1197 = vmatprep.subr.bf16.mxu0 %v1035
        %1198 = vmatpush2.bf16.msra.mxu0 %v1034
        %1199 = vmatprep.subr.bf16.mxu0 %v1032
        %1200 = vmatpush2.bf16.msra.mxu0 %v1031
        %1201 = vmatprep.subr.bf16.mxu0 %v1029
        %1202 = vmatpush2.bf16.msra.mxu0 %v1028
        %1203 = vmatprep.subr.bf16.mxu0 %v1026
        %1204 = vmatpush2.bf16.msra.mxu0 %v1025
        %1205 = vmatprep.subr.bf16.mxu0 %v1023
        %1206 = vmatpush2.bf16.msra.mxu0 %v1022
        %1207 = vmatprep.subr.bf16.mxu0 %v1020
        %1208 = vmatpush2.bf16.msra.mxu0 %v1019
        %1209 = vmatprep.subr.bf16.mxu0 %v1017
        %1210 = vmatpush2.bf16.msra.mxu0 %v1016
        %1211 = vmatprep.subr.bf16.mxu0 %v1014
        %1212 = vmatpush2.bf16.msra.mxu0 %v1013
        %1213 = vmatprep.mubr.bf16.mxu0 %v517
        %1214 = vmatmul.mubr.bf16.gmra.mxu0 %v516
        %v1215 = vpop.f32.mrf.mxu0
        %v1216 = vadd.f32 %v657, %v1215
        %v1217 = vpop.f32.mrf.mxu0
        %v1218 = vadd.f32 %v661, %v1217
        %v1219 = vpop.f32.mrf.mxu0
        %v1220 = vadd.f32 %v657, %v1219
        %v1221 = vpop.f32.mrf.mxu0
        %v1222 = vadd.f32 %v661, %v1221
        %1223 = vmatprep.mubr.bf16.mxu0 %v521
        %1224 = vmatmul.mubr.bf16.gmra.mxu0 %v520
        %v1225 = vpop.f32.mrf.mxu0
        %v1226 = vadd.f32 %v657, %v1225
        %v1227 = vpop.f32.mrf.mxu0
        %v1228 = vadd.f32 %v661, %v1227
        %v1229 = vpop.f32.mrf.mxu0
        %v1230 = vadd.f32 %v657, %v1229
        %v1231 = vpop.f32.mrf.mxu0
        %v1232 = vadd.f32 %v661, %v1231
        %1233 = vdwg.mxu0
        %1234 = vmatprep.subr.bf16.mxu0 %v1059
        %1235 = vmatpush1.bf16.msra.mxu0 %v1058
        %1236 = vmatprep.subr.bf16.mxu0 %v1056
        %1237 = vmatpush1.bf16.msra.mxu0 %v1055
        %1238 = vmatprep.subr.bf16.mxu0 %v1053
        %1239 = vmatpush1.bf16.msra.mxu0 %v1052
        %1240 = vmatprep.subr.bf16.mxu0 %v1050
        %1241 = vmatpush1.bf16.msra.mxu0 %v1049
        %1242 = vmatprep.subr.bf16.mxu0 %v1047
        %1243 = vmatpush1.bf16.msra.mxu0 %v1046
        %1244 = vmatprep.subr.bf16.mxu0 %v1044
        %1245 = vmatpush1.bf16.msra.mxu0 %v1043
        %1246 = vmatprep.subr.bf16.mxu0 %v1041
        %1247 = vmatpush1.bf16.msra.mxu0 %v1040
        %1248 = vmatprep.subr.bf16.mxu0 %v1038
        %1249 = vmatpush1.bf16.msra.mxu0 %v1037
        %1250 = vmatprep.subr.bf16.mxu0 %v1083
        %1251 = vmatpush2.bf16.msra.mxu0 %v1082
        %1252 = vmatprep.subr.bf16.mxu0 %v1080
        %1253 = vmatpush2.bf16.msra.mxu0 %v1079
        %1254 = vmatprep.subr.bf16.mxu0 %v1077
        %1255 = vmatpush2.bf16.msra.mxu0 %v1076
        %1256 = vmatprep.subr.bf16.mxu0 %v1074
        %1257 = vmatpush2.bf16.msra.mxu0 %v1073
        %1258 = vmatprep.subr.bf16.mxu0 %v1071
        %1259 = vmatpush2.bf16.msra.mxu0 %v1070
        %1260 = vmatprep.subr.bf16.mxu0 %v1068
        %1261 = vmatpush2.bf16.msra.mxu0 %v1067
        %1262 = vmatprep.subr.bf16.mxu0 %v1065
        %1263 = vmatpush2.bf16.msra.mxu0 %v1064
        %1264 = vmatprep.subr.bf16.mxu0 %v1062
        %1265 = vmatpush2.bf16.msra.mxu0 %v1061
        %1266 = vmatprep.mubr.bf16.mxu0 %v519
        %1267 = vmatmul.mubr.bf16.gmra.mxu0 %v518
        %v1268 = vpop.f32.mrf.mxu0
        %v1269 = vadd.f32 %v1216, %v1268
        %v1270 = vpop.f32.mrf.mxu0
        %v1271 = vadd.f32 %v1218, %v1270
        %v1272 = vpop.f32.mrf.mxu0
        %v1273 = vadd.f32 %v1220, %v1272
        %v1274 = vpop.f32.mrf.mxu0
        %v1275 = vadd.f32 %v1222, %v1274
        %1276 = vmatprep.mubr.bf16.mxu0 %v523
        %1277 = vmatmul.mubr.bf16.gmra.mxu0 %v522
        %v1278 = vpop.f32.mrf.mxu0
        %v1279 = vadd.f32 %v1226, %v1278
        %v1280 = vpop.f32.mrf.mxu0
        %v1281 = vadd.f32 %v1228, %v1280
        %v1282 = vpop.f32.mrf.mxu0
        %v1283 = vadd.f32 %v1230, %v1282
        %v1284 = vpop.f32.mrf.mxu0
        %v1285 = vadd.f32 %v1232, %v1284
        %1286 = vdwg.mxu0
        %1287 = vmatprep.subr.bf16.mxu0 0
        %1288 = vmatpush1.bf16.msra.mxu0 %v1012
        %1289 = vmatprep.subr.bf16.mxu0 0
        %1290 = vmatpush1.bf16.msra.mxu0 %v1009
        %1291 = vmatprep.subr.bf16.mxu0 0
        %1292 = vmatpush1.bf16.msra.mxu0 %v1006
        %1293 = vmatprep.subr.bf16.mxu0 0
        %1294 = vmatpush1.bf16.msra.mxu0 %v1003
        %1295 = vmatprep.subr.bf16.mxu0 0
        %1296 = vmatpush1.bf16.msra.mxu0 %v1000
        %1297 = vmatprep.subr.bf16.mxu0 0
        %1298 = vmatpush1.bf16.msra.mxu0 %v997
        %1299 = vmatprep.subr.bf16.mxu0 0
        %1300 = vmatpush1.bf16.msra.mxu0 %v994
        %1301 = vmatprep.subr.bf16.mxu0 0
        %1302 = vmatpush1.bf16.msra.mxu0 %v991
        %1303 = vmatprep.subr.bf16.mxu0 0
        %1304 = vmatpush2.bf16.msra.mxu0 %v1036
        %1305 = vmatprep.subr.bf16.mxu0 0
        %1306 = vmatpush2.bf16.msra.mxu0 %v1033
        %1307 = vmatprep.subr.bf16.mxu0 0
        %1308 = vmatpush2.bf16.msra.mxu0 %v1030
        %1309 = vmatprep.subr.bf16.mxu0 0
        %1310 = vmatpush2.bf16.msra.mxu0 %v1027
        %1311 = vmatprep.subr.bf16.mxu0 0
        %1312 = vmatpush2.bf16.msra.mxu0 %v1024
        %1313 = vmatprep.subr.bf16.mxu0 0
        %1314 = vmatpush2.bf16.msra.mxu0 %v1021
        %1315 = vmatprep.subr.bf16.mxu0 0
        %1316 = vmatpush2.bf16.msra.mxu0 %v1018
        %1317 = vmatprep.subr.bf16.mxu0 0
        %1318 = vmatpush2.bf16.msra.mxu0 %v1015
        %1319 = vmatprep.mubr.bf16.mxu0 %v517
        %1320 = vmatmul.mubr.bf16.gmra.mxu0 %v516
        %v1321 = vpop.f32.mrf.mxu0
        %v1322 = vadd.f32 %v665, %v1321
        %v1323 = vpop.f32.mrf.mxu0
        %v1324 = vpop.f32.mrf.mxu0
        %v1325 = vadd.f32 %v665, %v1324
        %v1326 = vpop.f32.mrf.mxu0
        %1327 = vmatprep.mubr.bf16.mxu0 %v521
        %1328 = vmatmul.mubr.bf16.gmra.mxu0 %v520
        %v1329 = vpop.f32.mrf.mxu0
        %v1330 = vadd.f32 %v665, %v1329
        %v1331 = vpop.f32.mrf.mxu0
        %v1332 = vpop.f32.mrf.mxu0
        %v1333 = vadd.f32 %v665, %v1332
        %v1334 = vpop.f32.mrf.mxu0
        %1335 = vdwg.mxu0
        %1336 = vmatprep.subr.bf16.mxu0 0
        %1337 = vmatpush1.bf16.msra.mxu0 %v1060
        %1338 = vmatprep.subr.bf16.mxu0 0
        %1339 = vmatpush1.bf16.msra.mxu0 %v1057
        %1340 = vmatprep.subr.bf16.mxu0 0
        %1341 = vmatpush1.bf16.msra.mxu0 %v1054
        %1342 = vmatprep.subr.bf16.mxu0 0
        %1343 = vmatpush1.bf16.msra.mxu0 %v1051
        %1344 = vmatprep.subr.bf16.mxu0 0
        %1345 = vmatpush1.bf16.msra.mxu0 %v1048
        %1346 = vmatprep.subr.bf16.mxu0 0
        %1347 = vmatpush1.bf16.msra.mxu0 %v1045
        %1348 = vmatprep.subr.bf16.mxu0 0
        %1349 = vmatpush1.bf16.msra.mxu0 %v1042
        %1350 = vmatprep.subr.bf16.mxu0 0
        %1351 = vmatpush1.bf16.msra.mxu0 %v1039
        %1352 = vmatprep.subr.bf16.mxu0 0
        %1353 = vmatpush2.bf16.msra.mxu0 %v1084
        %1354 = vmatprep.subr.bf16.mxu0 0
        %1355 = vmatpush2.bf16.msra.mxu0 %v1081
        %1356 = vmatprep.subr.bf16.mxu0 0
        %1357 = vmatpush2.bf16.msra.mxu0 %v1078
        %1358 = vmatprep.subr.bf16.mxu0 0
        %1359 = vmatpush2.bf16.msra.mxu0 %v1075
        %1360 = vmatprep.subr.bf16.mxu0 0
        %1361 = vmatpush2.bf16.msra.mxu0 %v1072
        %1362 = vmatprep.subr.bf16.mxu0 0
        %1363 = vmatpush2.bf16.msra.mxu0 %v1069
        %1364 = vmatprep.subr.bf16.mxu0 0
        %1365 = vmatpush2.bf16.msra.mxu0 %v1066
        %1366 = vmatprep.subr.bf16.mxu0 0
        %1367 = vmatpush2.bf16.msra.mxu0 %v1063
        %1368 = vmatprep.mubr.bf16.mxu0 %v519
        %1369 = vmatmul.mubr.bf16.gmra.mxu0 %v518
        %v1370 = vpop.f32.mrf.mxu0
        %v1371 = vadd.f32 %v1322, %v1370
        %v1372 = vpop.f32.mrf.mxu0
        %v1373 = vpop.f32.mrf.mxu0
        %v1374 = vadd.f32 %v1325, %v1373
        %v1375 = vpop.f32.mrf.mxu0
        %1376 = vmatprep.mubr.bf16.mxu0 %v523
        %1377 = vmatmul.mubr.bf16.gmra.mxu0 %v522
        %v1378 = vpop.f32.mrf.mxu0
        %v1379 = vadd.f32 %v1330, %v1378
        %v1380 = vpop.f32.mrf.mxu0
        %v1381 = vpop.f32.mrf.mxu0
        %v1382 = vadd.f32 %v1333, %v1381
        %v1383 = vpop.f32.mrf.mxu0
        %1384 = vdwg.mxu0
        %v1385 = vmax.f32 %v1269, 0.0
        %v1386 = vmax.f32 %v1271, 0.0
        %v1387 = vmax.f32 %v1371, 0.0
        %v1388 = vmax.f32 %v1273, 0.0
        %v1389 = vmax.f32 %v1275, 0.0
        %v1390 = vmax.f32 %v1374, 0.0
        %v1391 = vmax.f32 %v1279, 0.0
        %v1392 = vmax.f32 %v1281, 0.0
        %v1393 = vmax.f32 %v1379, 0.0
        %v1394 = vmax.f32 %v1283, 0.0
        %v1395 = vmax.f32 %v1285, 0.0
        %v1396 = vmax.f32 %v1382, 0.0
        %v1397 = vpack.c.bf16 %v1388, %v1385
        %v1398 = vpack.c.bf16 %v1389, %v1386
        %v1399 = vpack.c.bf16 %v1390, %v1387
        %v1400 = vpack.c.bf16 %v1394, %v1391
        %v1401 = vpack.c.bf16 %v1395, %v1392
        %v1402 = vpack.c.bf16 %v1396, %v1393
        %v1403 = vld [vmem:[#allocation5] sm:$0xf]
        %v1404 = vld [vmem:[#allocation5 + $0x4] sm:$0xf]
        %v1405 = vld [vmem:[#allocation5 + $0x8] sm:$0xf]
        %v1406 = vld [vmem:[#allocation5 + $0xc] sm:$0xf]
        %v1407 = vld [vmem:[#allocation5 + $0x10] sm:$0xf]
        %v1408 = vld [vmem:[#allocation5 + $0x14] sm:$0xf]
        %v1409 = vld [vmem:[#allocation5 + $0x18] sm:$0xf]
        %v1410 = vld [vmem:[#allocation5 + $0x1c] sm:$0xf]
        %v1411 = vld [vmem:[#allocation5 + $0x20] sm:$0xf]
        %v1412 = vld [vmem:[#allocation5 + $0x24] sm:$0xf]
        %v1413 = vld [vmem:[#allocation5 + $0x28] sm:$0xf]
        %v1414 = vld [vmem:[#allocation5 + $0x2c] sm:$0xf]
        %v1415 = vld [vmem:[#allocation5 + $0x30] sm:$0xf]
        %v1416 = vld [vmem:[#allocation5 + $0x34] sm:$0xf]
        %v1417 = vld [vmem:[#allocation5 + $0x38] sm:$0xf]
        %v1418 = vld [vmem:[#allocation5 + $0x3c] sm:$0xf]
        %v1419 = vld [vmem:[#allocation5 + $0x40] sm:$0xf]
        %v1420 = vld [vmem:[#allocation5 + $0x44] sm:$0xf]
        %v1421 = vld [vmem:[#allocation5 + $0x48] sm:$0xf]
        %v1422 = vld [vmem:[#allocation5 + $0x4c] sm:$0xf]
        %v1423 = vld [vmem:[#allocation5 + $0x50] sm:$0xf]
        %v1424 = vld [vmem:[#allocation5 + $0x54] sm:$0xf]
        %v1425 = vld [vmem:[#allocation5 + $0x58] sm:$0xf]
        %v1426 = vld [vmem:[#allocation5 + $0x5c] sm:$0xf]
        %v1427 = vld [vmem:[#allocation5 + $0x60] sm:$0xf]
        %v1428 = vld [vmem:[#allocation5 + $0x64] sm:$0xf]
        %v1429 = vld [vmem:[#allocation5 + $0x68] sm:$0xf]
        %v1430 = vld [vmem:[#allocation5 + $0x6c] sm:$0xf]
        %v1431 = vld [vmem:[#allocation5 + $0x70] sm:$0xf]
        %v1432 = vld [vmem:[#allocation5 + $0x74] sm:$0xf]
        %v1433 = vld [vmem:[#allocation5 + $0x78] sm:$0xf]
        %v1434 = vld [vmem:[#allocation5 + $0x7c] sm:$0xf]
        %v1435 = vld [vmem:[#allocation5 + $0x80] sm:$0xf]
        %v1436 = vld [vmem:[#allocation5 + $0x84] sm:$0xf]
        %v1437 = vld [vmem:[#allocation5 + $0x88] sm:$0xf]
        %v1438 = vld [vmem:[#allocation5 + $0x8c] sm:$0xf]
        %v1439 = vld [vmem:[#allocation5 + $0x90] sm:$0xf]
        %v1440 = vld [vmem:[#allocation5 + $0x94] sm:$0xf]
        %v1441 = vld [vmem:[#allocation5 + $0x98] sm:$0xf]
        %v1442 = vld [vmem:[#allocation5 + $0x9c] sm:$0xf]
        %v1443 = vld [vmem:[#allocation5 + $0xa0] sm:$0xf]
        %v1444 = vld [vmem:[#allocation5 + $0xa4] sm:$0xf]
        %v1445 = vld [vmem:[#allocation5 + $0xa8] sm:$0xf]
        %v1446 = vld [vmem:[#allocation5 + $0xac] sm:$0xf]
        %v1447 = vld [vmem:[#allocation5 + $0xb0] sm:$0xf]
        %v1448 = vld [vmem:[#allocation5 + $0xb4] sm:$0xf]
        %v1449 = vld [vmem:[#allocation5 + $0xb8] sm:$0xf]
        %v1450 = vld [vmem:[#allocation5 + $0xbc] sm:$0xf]
        %v1451 = vld [vmem:[%s6] sm:$0x1]
        %v1453 = vlaneseq
        %v1454 = vshrl.u32 %v1453, 7
        %v1455 = vsub.s32 0, %v1454
        %v1456 = vrot.slane %v1451, %v1455
        %v1506 = vunpack.c.l.b16 %v1403
        %v1507 = vunpack.c.l.b16 %v1404
        %v1508 = vunpack.c.l.b16 %v1405
        %v1509 = vunpack.c.l.b16 %v1406
        %v1510 = vunpack.c.l.b16 %v1407
        %v1511 = vunpack.c.l.b16 %v1408
        %v1512 = vunpack.c.l.b16 %v1409
        %v1513 = vunpack.c.l.b16 %v1410
        %v1514 = vunpack.c.l.b16 %v1411
        %v1515 = vunpack.c.l.b16 %v1412
        %v1516 = vunpack.c.l.b16 %v1413
        %v1517 = vunpack.c.l.b16 %v1414
        %v1518 = vunpack.c.l.b16 %v1415
        %v1519 = vunpack.c.l.b16 %v1416
        %v1520 = vunpack.c.l.b16 %v1417
        %v1521 = vunpack.c.l.b16 %v1418
        %v1522 = vunpack.c.l.b16 %v1419
        %v1523 = vunpack.c.l.b16 %v1420
        %v1524 = vunpack.c.l.b16 %v1421
        %v1525 = vunpack.c.l.b16 %v1422
        %v1526 = vunpack.c.l.b16 %v1423
        %v1527 = vunpack.c.l.b16 %v1424
        %v1528 = vunpack.c.l.b16 %v1425
        %v1529 = vunpack.c.l.b16 %v1426
        %v1530 = vunpack.c.l.b16 %v1427
        %v1531 = vunpack.c.l.b16 %v1428
        %v1532 = vunpack.c.l.b16 %v1429
        %v1533 = vunpack.c.l.b16 %v1430
        %v1534 = vunpack.c.l.b16 %v1431
        %v1535 = vunpack.c.l.b16 %v1432
        %v1536 = vunpack.c.l.b16 %v1433
        %v1537 = vunpack.c.l.b16 %v1434
        %v1538 = vunpack.c.l.b16 %v1435
        %v1539 = vunpack.c.l.b16 %v1436
        %v1540 = vunpack.c.l.b16 %v1437
        %v1541 = vunpack.c.l.b16 %v1438
        %v1542 = vunpack.c.l.b16 %v1439
        %v1543 = vunpack.c.l.b16 %v1440
        %v1544 = vunpack.c.l.b16 %v1441
        %v1545 = vunpack.c.l.b16 %v1442
        %v1546 = vunpack.c.l.b16 %v1443
        %v1547 = vunpack.c.l.b16 %v1444
        %v1548 = vunpack.c.l.b16 %v1445
        %v1549 = vunpack.c.l.b16 %v1446
        %v1550 = vunpack.c.l.b16 %v1447
        %v1551 = vunpack.c.l.b16 %v1448
        %v1552 = vunpack.c.l.b16 %v1449
        %v1553 = vunpack.c.l.b16 %v1450
        %v1554 = vpack.c.b16 %v1507, %v1506
        %v1555 = vpack.c.b16 %v1509, %v1508
        %v1556 = vpack.c.b16 %v1511, %v1510
        %v1557 = vpack.c.b16 %v1513, %v1512
        %v1558 = vpack.c.b16 %v1515, %v1514
        %v1559 = vpack.c.b16 %v1517, %v1516
        %v1560 = vpack.c.b16 %v1519, %v1518
        %v1561 = vpack.c.b16 %v1521, %v1520
        %v1562 = vpack.c.b16 %v1523, %v1522
        %v1563 = vpack.c.b16 %v1525, %v1524
        %v1564 = vpack.c.b16 %v1527, %v1526
        %v1565 = vpack.c.b16 %v1529, %v1528
        %v1566 = vpack.c.b16 %v1531, %v1530
        %v1567 = vpack.c.b16 %v1533, %v1532
        %v1568 = vpack.c.b16 %v1535, %v1534
        %v1569 = vpack.c.b16 %v1537, %v1536
        %v1570 = vpack.c.b16 %v1539, %v1538
        %v1571 = vpack.c.b16 %v1541, %v1540
        %v1572 = vpack.c.b16 %v1543, %v1542
        %v1573 = vpack.c.b16 %v1545, %v1544
        %v1574 = vpack.c.b16 %v1547, %v1546
        %v1575 = vpack.c.b16 %v1549, %v1548
        %v1576 = vpack.c.b16 %v1551, %v1550
        %v1577 = vpack.c.b16 %v1553, %v1552
        %1602 = vmatprep.subr.bf16.mxu0 0
        %1603 = vmatpush1.bf16.msra.mxu0 %v1561
        %1604 = vmatprep.subr.bf16.mxu0 0
        %1605 = vmatpush1.bf16.msra.mxu0 %v1560
        %1606 = vmatprep.subr.bf16.mxu0 0
        %1607 = vmatpush1.bf16.msra.mxu0 %v1559
        %1608 = vmatprep.subr.bf16.mxu0 0
        %1609 = vmatpush1.bf16.msra.mxu0 %v1558
        %1610 = vmatprep.subr.bf16.mxu0 0
        %1611 = vmatpush1.bf16.msra.mxu0 %v1557
        %1612 = vmatprep.subr.bf16.mxu0 0
        %1613 = vmatpush1.bf16.msra.mxu0 %v1556
        %1614 = vmatprep.subr.bf16.mxu0 0
        %1615 = vmatpush1.bf16.msra.mxu0 %v1555
        %1616 = vmatprep.subr.bf16.mxu0 0
        %1617 = vmatpush1.bf16.msra.mxu0 %v1554
        %1618 = vmatprep.subr.bf16.mxu0 0
        %1619 = vmatpush2.bf16.msra.mxu0 %v1569
        %1620 = vmatprep.subr.bf16.mxu0 0
        %1621 = vmatpush2.bf16.msra.mxu0 %v1568
        %1622 = vmatprep.subr.bf16.mxu0 0
        %1623 = vmatpush2.bf16.msra.mxu0 %v1567
        %1624 = vmatprep.subr.bf16.mxu0 0
        %1625 = vmatpush2.bf16.msra.mxu0 %v1566
        %1626 = vmatprep.subr.bf16.mxu0 0
        %1627 = vmatpush2.bf16.msra.mxu0 %v1565
        %1628 = vmatprep.subr.bf16.mxu0 0
        %1629 = vmatpush2.bf16.msra.mxu0 %v1564
        %1630 = vmatprep.subr.bf16.mxu0 0
        %1631 = vmatpush2.bf16.msra.mxu0 %v1563
        %1632 = vmatprep.subr.bf16.mxu0 0
        %1633 = vmatpush2.bf16.msra.mxu0 %v1562
        %1634 = vmatprep.mubr.bf16.mxu0 %v1398
        %1635 = vmatmul.mubr.bf16.gmra.mxu0 %v1397
        %v1636 = vpop.f32.mrf.mxu0
        %v1637 = vadd.f32 %v1456, %v1636
        %v1638 = vpop.f32.mrf.mxu0
        %v1639 = vpop.f32.mrf.mxu0
        %v1640 = vadd.f32 %v1456, %v1639
        %v1641 = vpop.f32.mrf.mxu0
        %1642 = vmatprep.mubr.bf16.mxu0 %v1401
        %1643 = vmatmul.mubr.bf16.gmra.mxu0 %v1400
        %v1644 = vpop.f32.mrf.mxu0
        %v1645 = vadd.f32 %v1456, %v1644
        %v1646 = vpop.f32.mrf.mxu0
        %v1647 = vpop.f32.mrf.mxu0
        %v1648 = vadd.f32 %v1456, %v1647
        %v1649 = vpop.f32.mrf.mxu0
        %1650 = vdwg.mxu0
        %1651 = vmatprep.subr.bf16.mxu0 0
        %1652 = vmatpush1.bf16.msra.mxu0 %v1577
        %1653 = vmatprep.subr.bf16.mxu0 0
        %1654 = vmatpush1.bf16.msra.mxu0 %v1576
        %1655 = vmatprep.subr.bf16.mxu0 0
        %1656 = vmatpush1.bf16.msra.mxu0 %v1575
        %1657 = vmatprep.subr.bf16.mxu0 0
        %1658 = vmatpush1.bf16.msra.mxu0 %v1574
        %1659 = vmatprep.subr.bf16.mxu0 0
        %1660 = vmatpush1.bf16.msra.mxu0 %v1573
        %1661 = vmatprep.subr.bf16.mxu0 0
        %1662 = vmatpush1.bf16.msra.mxu0 %v1572
        %1663 = vmatprep.subr.bf16.mxu0 0
        %1664 = vmatpush1.bf16.msra.mxu0 %v1571
        %1665 = vmatprep.subr.bf16.mxu0 0
        %1666 = vmatpush1.bf16.msra.mxu0 %v1570
        %1667 = vmatprep.subr.bf16.mxu0 0
        %1668 = vmatpush2.bf16.msra.mxu0 0
        %1669 = vmatprep.subr.bf16.mxu0 0
        %1670 = vmatpush2.bf16.msra.mxu0 0
        %1671 = vmatprep.subr.bf16.mxu0 0
        %1672 = vmatpush2.bf16.msra.mxu0 0
        %1673 = vmatprep.subr.bf16.mxu0 0
        %1674 = vmatpush2.bf16.msra.mxu0 0
        %1675 = vmatprep.subr.bf16.mxu0 0
        %1676 = vmatpush2.bf16.msra.mxu0 0
        %1677 = vmatprep.subr.bf16.mxu0 0
        %1678 = vmatpush2.bf16.msra.mxu0 0
        %1679 = vmatprep.subr.bf16.mxu0 0
        %1680 = vmatpush2.bf16.msra.mxu0 0
        %1681 = vmatprep.subr.bf16.mxu0 0
        %1682 = vmatpush2.bf16.msra.mxu0 0
        %1683 = vmatprep.mubr.bf16.mxu0 0
        %1684 = vmatmul.mubr.bf16.gmra.mxu0 %v1399
        %v1685 = vpop.f32.mrf.mxu0
        %v1686 = vadd.f32 %v1637, %v1685
        %v1687 = vpop.f32.mrf.mxu0
        %v1688 = vpop.f32.mrf.mxu0
        %v1689 = vadd.f32 %v1640, %v1688
        %v1690 = vpop.f32.mrf.mxu0
        %1691 = vmatprep.mubr.bf16.mxu0 0
        %1692 = vmatmul.mubr.bf16.gmra.mxu0 %v1402
        %v1693 = vpop.f32.mrf.mxu0
        %v1694 = vadd.f32 %v1645, %v1693
        %v1695 = vpop.f32.mrf.mxu0
        %v1696 = vpop.f32.mrf.mxu0
        %v1697 = vadd.f32 %v1648, %v1696
        %v1698 = vpop.f32.mrf.mxu0
        %1699 = vdwg.mxu0
        %v1700 = vtanh.pop %v1686
        %v1701 = vtanh.pop %v1689
        %v1702 = vtanh.pop %v1694
        %v1703 = vtanh.pop %v1697
        %1704 = vst [vmem:[%s302] sm:$0xff] %v1700
        %1705 = vst [vmem:[%s302 + $0x8] sm:$0xff] %v1701
        %1706 = vst [vmem:[%s302 + $0x10] sm:$0xff] %v1702
        %1707 = vst [vmem:[%s302 + $0x18] sm:$0xff] %v1703
        %s1708 = sand.u32 %s183, 1
        %s1709 = scalar_lea.sflag [#allocation4], %s1708
        %s1710 = sand.u32 %s183, 1
        %s1711 = smul.addr %s1710, 32
        %s1712 = scalar_lea.vmem [#allocation7], %s1711
        // Predicated region
        $region57: #{tpu_custom_call.1} parent=47 // pred_check
          %p1713 = pneg %p193
        $region58: #{tpu_custom_call.1} parent=47 // pred_check_branch
          %1715 = sbr.rel (%p1713) target = $region60
        $region59: #{tpu_custom_call.1} parent=47 // pred_region
          %s1716 = smul.u32 4, %s23
          %s1718 = ssub.s32 512, 512
          %1719 = vsyncadd %s1709, %s1718
          %s1720 = smul.addr %s1716, 128
          %s1721 = scalar_lea.hbm %s7, %s1720
          %s1722 = sshll.u32 %s1712, 4
          %s1723 = int_to_ptr.vmem [resolvable:$true] %s1722
          %1728 = dma.vmem_to_hbm [thread:$0]  %s1723, 512, %s1721, %s1709, 128, 128, 8
        $region60: #{tpu_custom_call.1} parent=47 // pred_fallthru
          _
      $region48: #{tpu_custom_call.1} parent=5 // pred_fallthru
        _
      %p1729 = scmp.le.s32.totalorder 2, %s18
      // Predicated region
      $region61: #{tpu_custom_call.1} parent=5 // pred_check
        %p1730 = pneg %p1729
      $region62: #{tpu_custom_call.1} parent=5 // pred_check_branch
        %1732 = sbr.rel (%p1730) target = $region64
      $region63: #{tpu_custom_call.1} parent=5 // pred_region
        %s1733 = ssub.s32 %s18, 2
        // Predicated region
        $region65: #{tpu_custom_call.1} parent=63 // pred_check
          %p1734 = pneg %p199
        $region66: #{tpu_custom_call.1} parent=63 // pred_check_branch
          %1736 = sbr.rel (%p1734) target = $region68
        $region67: #{tpu_custom_call.1} parent=63 // pred_region
          %s1737 = sand.u32 %s184, 1
          %s1738 = scalar_lea.sflag [#allocation4], %s1737
          %s1739 = sand.u32 %s184, 1
          %s1740 = smul.addr %s1739, 32
          %s1741 = scalar_lea.vmem [#allocation7], %s1740
          %1742 = dma.done %s1738, 512
        $region68: #{tpu_custom_call.1} parent=63 // pred_fallthru
          _
      $region64: #{tpu_custom_call.1} parent=5 // pred_fallthru
        _
    $region6: #{tpu_custom_call.1} parent=1 // loop_footer
      %s22 = sadd.s32 1, %s18
    $region7: #{tpu_custom_call.1} parent=1 // loop_footer_branch
      %17 = sbr.rel target = $region3
    $region8: #{tpu_custom_call.1} parent=1 // loop_exit
      _
    %1743 = vsyncpa [#allocation3], 1
    %s1744 = scalar_lea.sflag [#allocation3], 1
    %1745 = vsyncpa %s1744, 1
    %1746 = vsyncpa [#allocation6], 1
    %1747 = vsyncpa [#allocation4], 1
    %s1748 = scalar_lea.sflag [#allocation4], 1
    %1749 = vsyncpa %s1748, 1

</llo_original>
